<compile_context>
chip_gen: v7x
topology: tpu7x:2x2x1
jax: 0.10.0
libtpu: 0.0.40
codegen_flags: <defaults>
</compile_context>

<pallas_src>
import numpy as np
import jax
import jax.numpy as jnp
from jax.experimental import pallas as pl
from jax.experimental.pallas import tpu as pltpu

TB_MAX = 1024      # max points per grid step (lane-dense; multiple of 128)
LANE = 128
N_CORNERS = 16     # 2^4 corners of a 4-D grid cell

# corner offsets in (t, x, y, z), z fastest -- identical order to the module
GRID_MATRIX = [(t, x, y, z) for t in (0, 1) for x in (0, 1)
               for y in (0, 1) for z in (0, 1)]

_PLANES = ("plane_tx", "plane_yz", "plane_ty", "plane_xz", "plane_tz", "plane_xy")


# -----------------------------------------------------------------------------
# Pallas kernel: in-kernel point prep, 1-hot box-table gathers (MXU),
# pairwise product accumulate, weighted factor reduce.
# -----------------------------------------------------------------------------
def _make_kernel(resolution, strides, channels, factors):
    R0, R1, R2, R3 = (int(r) for r in resolution)
    C, F = int(channels), int(factors)
    s_tx, s_yz, s_ty, s_xz, s_tz, s_xy = (int(s) for s in strides)

    def kernel(tx_ref, yz_ref, ty_ref, xz_ref, tz_ref, xy_ref, pos_ref, o_ref):
        # table refs : (C*F, NR_p) f32  box-summed plane tables (VMEM resident)
        # pos_ref    : (8, TB)    f32   rows 0..3 = normalized (t, x, y, z)
        # o_ref      : (C, TB)    f32
        nb = pos_ref.shape[1]

        # ---- per-point prep (mask, voxel index, frac) -----------------------
        def prep(axis, res):
            p = pos_ref[axis:axis + 1, :]                       # (1, nb)
            ok = (p >= 0.0) & (p < 1.0)
            pv = p * float(res)
            ii = pv.astype(jnp.int32)                           # trunc == .to(long)
            fr = pv - ii.astype(jnp.float32)
            ii = jnp.clip(ii, 0, res - 1)                       # safe for masked pts
            return ii, fr, ok

        i_t, f_t, ok_t = prep(0, R0)
        i_x, f_x, ok_x = prep(1, R1)
        i_y, f_y, ok_y = prep(2, R2)
        i_z, f_z, ok_z = prep(3, R3)
        valid = (ok_t & ok_x & ok_y & ok_z).astype(jnp.float32)  # (1, nb)

        # ---- one-hot gathers of the box-summed tables on the MXU ------------
        iotas = {}                                   # one iota shared by all planes

        def gather(tbl_ref, row):                    # -> (C*F, nb)
            nr = tbl_ref.shape[1]
            if nr not in iotas:
                iotas[nr] = jax.lax.broadcasted_iota(jnp.int32, (nr, nb), 0)
            hot = (iotas[nr] == row).astype(jnp.float32)         # (nr, nb)
            return jnp.dot(tbl_ref[...], hot, preferred_element_type=jnp.float32)

        # 16-corner sum factorizes per plane pair (disjoint axes); accumulate
        # pairwise so only ~3 (C*F, nb) f32 temporaries are live at once.
        acc = gather(tx_ref, i_t * s_tx + i_x) * gather(yz_ref, i_y * s_yz + i_z)
        acc = acc + gather(ty_ref, i_t * s_ty + i_y) * gather(xz_ref, i_x * s_xz + i_z)
        acc = acc + gather(tz_ref, i_t * s_tz + i_z) * gather(xy_ref, i_x * s_xy + i_y)

        # ---- masked Kronecker corner weights over the 16 factors ------------
        # factor index f = 8*dt + 4*dx + 2*dy + dz (t slowest, z fastest)
        fi = jax.lax.broadcasted_iota(jnp.int32, (F, nb), 0)

        def sel(bit, fr):                            # (F, nb)
            hi_bit = ((fi >> bit) & 1) == 1
            return jnp.where(hi_bit, fr, 1.0 - fr)

        w = sel(3, f_t) * sel(2, f_x) * sel(1, f_y) * sel(0, f_z)
        w = w * valid                                # fold validity mask in

        # ---- grouped reduce over the F factors of each channel --------------
        # reshape splits the 128 sublanes on a tile boundary (F=16): layout-free
        out = (acc.reshape(C, F, nb) * w[None, :, :]).sum(axis=1)   # (C, nb)
        o_ref[...] = out

    return kernel


# -----------------------------------------------------------------------------
# Params + wrapper
# -----------------------------------------------------------------------------
def make_params(key, factors, resolution, channels):
    F0, F1, F2 = factors
    R0, R1, R2, R3 = resolution
    shapes = {
        "plane_tx": (F0, R2 + 1, R3 + 1, channels),
        "plane_ty": (F1, R1 + 1, R3 + 1, channels),
        "plane_tz": (F2, R1 + 1, R2 + 1, channels),
        "plane_xy": (F2, R0 + 1, R3 + 1, channels),
        "plane_xz": (F1, R0 + 1, R2 + 1, channels),
        "plane_yz": (F0, R0 + 1, R1 + 1, channels),
    }
    keys = jax.random.split(key, len(shapes))
    return {name: 0.1 * jax.random.normal(k, shape, jnp.float32)
            for k, (name, shape) in zip(keys, shapes.items())}


def _box_flatten(p):
    # (F, D0, D1, C): 2x2 box-sum over the two spatial dims (exactly the four
    # corner terms of the original 4-hot gather, summed once offline), then
    # flatten to (C*F, (D0-1)*(D1-1)); feature index = c*F + f, row = i0*(D1-1)+i1.
    box = p[:, :-1, :-1, :] + p[:, :-1, 1:, :] + p[:, 1:, :-1, :] + p[:, 1:, 1:, :]
    F, d0, d1, C = box.shape
    flat = jnp.transpose(box, (3, 0, 1, 2)).reshape(C * F, d0 * d1)
    return flat, d1


def _choose_tile(batch):
    n = pl.cdiv(batch, LANE)                 # 128-wide lane groups needed
    if n <= 1:
        return LANE
    # keep the single "parallel" grid axis >= 2 steps so it can split across
    # the two TensorCores of v7x; cap the tile at TB_MAX.
    return int(min(TB_MAX, pl.cdiv(n, 2) * LANE))


def feature_voxel_4d_forward(params, positions, resolution, coord_range, *,
                             channel_major=False):
    lo = jnp.asarray(coord_range[0], jnp.float32)
    hi = jnp.asarray(coord_range[1], jnp.float32)
    F = int(params["plane_tx"].shape[0])
    C = int(params["plane_tx"].shape[-1])
    R0, R1, R2, R3 = (int(r) for r in resolution)
    assert F == 16, "FeatureVoxel4D requires 16 factors (2^4 multilinear stencil)"
    # The module's plane shapes vs. indexing are only mutually consistent for a
    # uniform resolution; the flattened-row gather inherits that requirement.
    assert R0 == R1 == R2 == R3, "FeatureVoxel4D requires a uniform resolution"

    positions = positions.astype(jnp.float32)
    B0 = int(positions.shape[0])
    tb = _choose_tile(B0)
    B_pad = pl.cdiv(B0, tb) * tb

    # normalized coords; padded points get -1.0 (out of range -> zero weights)
    pos01 = (positions - lo[None, :]) / (hi - lo)[None, :]
    if B_pad != B0:
        pad = jnp.full((B_pad - B0, 4), -1.0, jnp.float32)
        pos01 = jnp.concatenate([pos01, pad], axis=0)
    # points in lanes: (8, B_pad); rows 0..3 = (t, x, y, z), rows 4..7 unused
    pos_rows = jnp.concatenate([pos01.T, jnp.zeros((4, B_pad), jnp.float32)], axis=0)

    # 2x2 box-summed, channel-major flattened tables (one-hot gather in kernel).
    # TODO(synk): tables are assumed to fit VMEM (~25 KiB each at resolution 7);
    # for very large resolutions (R >~ 90 on v7x) switch to memory_space=pl.ANY
    # + manual DMA gather, and consider pl.Buffered(1) / vmem_limit_bytes on the
    # constant-index table specs to avoid double-buffering them.
    tables, strides = [], []
    for name in _PLANES:
        flat, stride = _box_flatten(params[name])
        tables.append(flat)
        strides.append(stride)

    kernel = _make_kernel((R0, R1, R2, R3), strides, C, F)
    grid = (B_pad // tb,)

    in_specs = ([pl.BlockSpec(t.shape, lambda i: (0, 0)) for t in tables] +
                [pl.BlockSpec((8, tb), lambda i: (0, i))])
    out_specs = pl.BlockSpec((C, tb), lambda i: (0, i))

    nr_total = sum(int(t.shape[1]) for t in tables)
    table_bytes = sum(int(np.prod(t.shape)) * 4 for t in tables)
    flops = int(B_pad) * (2 * C * F * nr_total + 6 * C * F + 60 * F + 40)
    bytes_accessed = table_bytes + int(B_pad) * (8 + C) * 4

    out = pl.pallas_call(
        kernel,
        out_shape=jax.ShapeDtypeStruct((C, B_pad), jnp.float32),
        grid=grid,
        in_specs=in_specs,
        out_specs=out_specs,
        compiler_params=pltpu.CompilerParams(dimension_semantics=("parallel",)),
        cost_estimate=pl.CostEstimate(flops=flops, transcendentals=0,
                                      bytes_accessed=bytes_accessed),
    )(*tables, pos_rows)

    if channel_major:
        return out[:, :B0]                # (C, B0): skips the extra HBM transpose
    return jnp.transpose(out)[:B0]        # (B0, C), matches the module's output


# -----------------------------------------------------------------------------
# Pure-JAX reference mirroring the PyTorch forward (for correctness check)
# -----------------------------------------------------------------------------
def feature_voxel_4d_reference(params, positions, resolution, coord_range):
    resolution_f = jnp.asarray(resolution, jnp.float32)
    lo = jnp.asarray(coord_range[0], jnp.float32)
    hi = jnp.asarray(coord_range[1], jnp.float32)
    C = params["plane_tx"].shape[-1]
    B = positions.shape[0]

    pos01 = (positions.astype(jnp.float32) - lo[None, :]) / (hi - lo)[None, :]
    mask = jnp.all((pos01 < 1.0) & (pos01 >= 0.0), axis=1)
    posv = pos01 * resolution_f[None, :]
    idx_raw = posv.astype(jnp.int32)
    frac = posv - idx_raw.astype(jnp.float32)
    idx = jnp.clip(idx_raw, 0, resolution_f.astype(jnp.int32)[None, :] - 1)

    corners = jnp.asarray(GRID_MATRIX, jnp.int32)
    gi = idx[None, :, :] + corners[:, None, :]
    t, x, y, z = gi[..., 0], gi[..., 1], gi[..., 2], gi[..., 3]

    f0 = params["plane_tx"][:, t, x] * params["plane_yz"][:, y, z]
    f1 = params["plane_ty"][:, t, y] * params["plane_xz"][:, x, z]
    f2 = params["plane_tz"][:, t, z] * params["plane_xy"][:, x, y]
    feat = f0.sum(1) + f1.sum(1) + f2.sum(1)          # (F, B, C)
    feat = jnp.transpose(feat, (1, 2, 0))             # (B, C, 16)

    ft, fx, fy, fz = frac[:, 0], frac[:, 1], frac[:, 2], frac[:, 3]

    def wmat(p):                                      # (B, 1, 1, 2)
        return jnp.stack([1 - p, p], axis=-1)[:, None, None, :]

    feat = feat.reshape(B, C, 2, 8)
    feat = jnp.matmul(wmat(ft), feat).reshape(B, C, 2, 4)
    feat = jnp.matmul(wmat(fx), feat).reshape(B, C, 2, 2)
    feat = jnp.matmul(wmat(fy), feat).reshape(B, C, 2, 1)
    feat = jnp.matmul(wmat(fz), feat)[:, :, 0, 0]      # (B, C)
    return feat * mask.astype(jnp.float32)[:, None]


if __name__ == "__main__":
    key = jax.random.PRNGKey(0)
    channels = 8
    factors = (16, 16, 16)        # must be 16: reshaped into the 2^4 multilinear stencil
    resolution = (7, 7, 7, 7)
    coord_range = (jnp.full((4,), -1.0, jnp.float32),
                   jnp.full((4,), 1.0, jnp.float32))

    kp, k1, k2 = jax.random.split(key, 3)
    params = make_params(kp, factors, resolution, channels)

    # B=30 exercises the padding path (single grid step); B=1000 exercises the
    # multi-step grid (tb=512, 2 steps) and the adaptive tile chooser.
    for kpos, B in ((k1, 30), (k2, 1000)):
        positions = jax.random.uniform(kpos, (B, 4), jnp.float32,
                                       minval=-1.2, maxval=1.2)  # some out of range
        out = feature_voxel_4d_forward(params, positions, resolution, coord_range)
        out = jax.block_until_ready(out)

        ref = feature_voxel_4d_reference(params, positions, resolution, coord_range)
        np.testing.assert_allclose(np.asarray(out), np.asarray(ref),
                                   rtol=5e-4, atol=1e-5)
    print("KERNEL_OK")
</pallas_src>

<mosaic_0001>
module attributes {stable_mosaic.version = 11 : i64} {
  func.func @kernel(%arg0: i32, %arg1: memref<128x49xf32, #tpu.memory_space<vmem>>, %arg2: memref<128x49xf32, #tpu.memory_space<vmem>>, %arg3: memref<128x49xf32, #tpu.memory_space<vmem>>, %arg4: memref<128x49xf32, #tpu.memory_space<vmem>>, %arg5: memref<128x49xf32, #tpu.memory_space<vmem>>, %arg6: memref<128x49xf32, #tpu.memory_space<vmem>>, %arg7: memref<8x128xf32, #tpu.memory_space<vmem>>, %arg8: memref<8x128xf32, #tpu.memory_space<vmem>>) attributes {dimension_semantics = [#tpu.dimension_semantics<parallel>], iteration_bounds = array<i64: 1>, scalar_prefetch = 0 : i64, scratch_operands = 0 : i64, tpu.core_type = #tpu.core_type<tc>, window_params = [{pipeline_mode = #tpu.pipeline_mode<synchronous>, transform_indices = @transform_0, window_bounds = array<i64: 128, 49>}, {pipeline_mode = #tpu.pipeline_mode<synchronous>, transform_indices = @transform_1, window_bounds = array<i64: 128, 49>}, {pipeline_mode = #tpu.pipeline_mode<synchronous>, transform_indices = @transform_2, window_bounds = array<i64: 128, 49>}, {pipeline_mode = #tpu.pipeline_mode<synchronous>, transform_indices = @transform_3, window_bounds = array<i64: 128, 49>}, {pipeline_mode = #tpu.pipeline_mode<synchronous>, transform_indices = @transform_4, window_bounds = array<i64: 128, 49>}, {pipeline_mode = #tpu.pipeline_mode<synchronous>, transform_indices = @transform_5, window_bounds = array<i64: 128, 49>}, {transform_indices = @transform_6, window_bounds = array<i64: 8, 128>}, {transform_indices = @transform_7, window_bounds = array<i64: 8, 128>}]} {
    %c0 = arith.constant 0 : index
    %c0_0 = arith.constant 0 : index
    %0 = vector.load %arg7[%c0, %c0_0] : memref<8x128xf32, #tpu.memory_space<vmem>>, vector<1x128xf32>
    %cst = arith.constant 0.000000e+00 : f32
    %1 = vector.broadcast %cst : f32 to vector<1x128xf32>
    %2 = arith.cmpf oge, %0, %1 : vector<1x128xf32>
    %cst_1 = arith.constant 1.000000e+00 : f32
    %3 = vector.broadcast %cst_1 : f32 to vector<1x128xf32>
    %4 = arith.cmpf olt, %0, %3 : vector<1x128xf32>
    %5 = arith.andi %2, %4 : vector<1x128xi1>
    %cst_2 = arith.constant 7.000000e+00 : f32
    %6 = vector.broadcast %cst_2 : f32 to vector<1x128xf32>
    %7 = arith.mulf %0, %6 : vector<1x128xf32>
    %8 = arith.fptosi %7 : vector<1x128xf32> to vector<1x128xi32>
    %9 = arith.sitofp %8 : vector<1x128xi32> to vector<1x128xf32>
    %10 = arith.subf %7, %9 : vector<1x128xf32>
    %c0_i32 = arith.constant 0 : i32
    %c6_i32 = arith.constant 6 : i32
    %11 = vector.broadcast %c0_i32 : i32 to vector<1x128xi32>
    %12 = arith.maxsi %11, %8 : vector<1x128xi32>
    %13 = vector.broadcast %c6_i32 : i32 to vector<1x128xi32>
    %14 = arith.minsi %13, %12 : vector<1x128xi32>
    %c1 = arith.constant 1 : index
    %c0_3 = arith.constant 0 : index
    %15 = vector.load %arg7[%c1, %c0_3] : memref<8x128xf32, #tpu.memory_space<vmem>>, vector<1x128xf32>
    %cst_4 = arith.constant 0.000000e+00 : f32
    %16 = vector.broadcast %cst_4 : f32 to vector<1x128xf32>
    %17 = arith.cmpf oge, %15, %16 : vector<1x128xf32>
    %cst_5 = arith.constant 1.000000e+00 : f32
    %18 = vector.broadcast %cst_5 : f32 to vector<1x128xf32>
    %19 = arith.cmpf olt, %15, %18 : vector<1x128xf32>
    %20 = arith.andi %17, %19 : vector<1x128xi1>
    %cst_6 = arith.constant 7.000000e+00 : f32
    %21 = vector.broadcast %cst_6 : f32 to vector<1x128xf32>
    %22 = arith.mulf %15, %21 : vector<1x128xf32>
    %23 = arith.fptosi %22 : vector<1x128xf32> to vector<1x128xi32>
    %24 = arith.sitofp %23 : vector<1x128xi32> to vector<1x128xf32>
    %25 = arith.subf %22, %24 : vector<1x128xf32>
    %c0_i32_7 = arith.constant 0 : i32
    %c6_i32_8 = arith.constant 6 : i32
    %26 = vector.broadcast %c0_i32_7 : i32 to vector<1x128xi32>
    %27 = arith.maxsi %26, %23 : vector<1x128xi32>
    %28 = vector.broadcast %c6_i32_8 : i32 to vector<1x128xi32>
    %29 = arith.minsi %28, %27 : vector<1x128xi32>
    %c2 = arith.constant 2 : index
    %c0_9 = arith.constant 0 : index
    %30 = vector.load %arg7[%c2, %c0_9] : memref<8x128xf32, #tpu.memory_space<vmem>>, vector<1x128xf32>
    %cst_10 = arith.constant 0.000000e+00 : f32
    %31 = vector.broadcast %cst_10 : f32 to vector<1x128xf32>
    %32 = arith.cmpf oge, %30, %31 : vector<1x128xf32>
    %cst_11 = arith.constant 1.000000e+00 : f32
    %33 = vector.broadcast %cst_11 : f32 to vector<1x128xf32>
    %34 = arith.cmpf olt, %30, %33 : vector<1x128xf32>
    %35 = arith.andi %32, %34 : vector<1x128xi1>
    %cst_12 = arith.constant 7.000000e+00 : f32
    %36 = vector.broadcast %cst_12 : f32 to vector<1x128xf32>
    %37 = arith.mulf %30, %36 : vector<1x128xf32>
    %38 = arith.fptosi %37 : vector<1x128xf32> to vector<1x128xi32>
    %39 = arith.sitofp %38 : vector<1x128xi32> to vector<1x128xf32>
    %40 = arith.subf %37, %39 : vector<1x128xf32>
    %c0_i32_13 = arith.constant 0 : i32
    %c6_i32_14 = arith.constant 6 : i32
    %41 = vector.broadcast %c0_i32_13 : i32 to vector<1x128xi32>
    %42 = arith.maxsi %41, %38 : vector<1x128xi32>
    %43 = vector.broadcast %c6_i32_14 : i32 to vector<1x128xi32>
    %44 = arith.minsi %43, %42 : vector<1x128xi32>
    %c3 = arith.constant 3 : index
    %c0_15 = arith.constant 0 : index
    %45 = vector.load %arg7[%c3, %c0_15] : memref<8x128xf32, #tpu.memory_space<vmem>>, vector<1x128xf32>
    %cst_16 = arith.constant 0.000000e+00 : f32
    %46 = vector.broadcast %cst_16 : f32 to vector<1x128xf32>
    %47 = arith.cmpf oge, %45, %46 : vector<1x128xf32>
    %cst_17 = arith.constant 1.000000e+00 : f32
    %48 = vector.broadcast %cst_17 : f32 to vector<1x128xf32>
    %49 = arith.cmpf olt, %45, %48 : vector<1x128xf32>
    %50 = arith.andi %47, %49 : vector<1x128xi1>
    %cst_18 = arith.constant 7.000000e+00 : f32
    %51 = vector.broadcast %cst_18 : f32 to vector<1x128xf32>
    %52 = arith.mulf %45, %51 : vector<1x128xf32>
    %53 = arith.fptosi %52 : vector<1x128xf32> to vector<1x128xi32>
    %54 = arith.sitofp %53 : vector<1x128xi32> to vector<1x128xf32>
    %55 = arith.subf %52, %54 : vector<1x128xf32>
    %c0_i32_19 = arith.constant 0 : i32
    %c6_i32_20 = arith.constant 6 : i32
    %56 = vector.broadcast %c0_i32_19 : i32 to vector<1x128xi32>
    %57 = arith.maxsi %56, %53 : vector<1x128xi32>
    %58 = vector.broadcast %c6_i32_20 : i32 to vector<1x128xi32>
    %59 = arith.minsi %58, %57 : vector<1x128xi32>
    %60 = arith.andi %5, %20 : vector<1x128xi1>
    %61 = arith.andi %60, %35 : vector<1x128xi1>
    %62 = arith.andi %61, %50 : vector<1x128xi1>
    %63 = arith.extui %62 : vector<1x128xi1> to vector<1x128xi32>
    %64 = arith.sitofp %63 : vector<1x128xi32> to vector<1x128xf32>
    %c7_i32 = arith.constant 7 : i32
    %65 = vector.broadcast %c7_i32 : i32 to vector<1x128xi32>
    %66 = arith.muli %14, %65 : vector<1x128xi32>
    %67 = arith.addi %66, %29 : vector<1x128xi32>
    %68 = tpu.iota {dimensions = array<i32: 0>} : vector<49x128xi32>
    %69 = vector.broadcast %67 : vector<1x128xi32> to vector<49x128xi32>
    %70 = arith.cmpi eq, %68, %69 : vector<49x128xi32>
    %71 = arith.extui %70 : vector<49x128xi1> to vector<49x128xi32>
    %72 = arith.sitofp %71 : vector<49x128xi32> to vector<49x128xf32>
    %c0_21 = arith.constant 0 : index
    %c0_22 = arith.constant 0 : index
    %73 = vector.load %arg1[%c0_21, %c0_22] : memref<128x49xf32, #tpu.memory_space<vmem>>, vector<128x49xf32>
    %cst_23 = arith.constant dense<0.000000e+00> : vector<128x128xf32>
    %74 = tpu.matmul %73, %72, %cst_23 {dimension_numbers = #tpu.dot_dimension_numbers<[1], [0], [0], [1], [0, 0, 1, 1], [], []>} : vector<128x49xf32>, vector<49x128xf32>, vector<128x128xf32> -> vector<128x128xf32>
    %c7_i32_24 = arith.constant 7 : i32
    %75 = vector.broadcast %c7_i32_24 : i32 to vector<1x128xi32>
    %76 = arith.muli %44, %75 : vector<1x128xi32>
    %77 = arith.addi %76, %59 : vector<1x128xi32>
    %78 = vector.broadcast %77 : vector<1x128xi32> to vector<49x128xi32>
    %79 = arith.cmpi eq, %68, %78 : vector<49x128xi32>
    %80 = arith.extui %79 : vector<49x128xi1> to vector<49x128xi32>
    %81 = arith.sitofp %80 : vector<49x128xi32> to vector<49x128xf32>
    %c0_25 = arith.constant 0 : index
    %c0_26 = arith.constant 0 : index
    %82 = vector.load %arg2[%c0_25, %c0_26] : memref<128x49xf32, #tpu.memory_space<vmem>>, vector<128x49xf32>
    %cst_27 = arith.constant dense<0.000000e+00> : vector<128x128xf32>
    %83 = tpu.matmul %82, %81, %cst_27 {dimension_numbers = #tpu.dot_dimension_numbers<[1], [0], [0], [1], [0, 0, 1, 1], [], []>} : vector<128x49xf32>, vector<49x128xf32>, vector<128x128xf32> -> vector<128x128xf32>
    %84 = arith.mulf %74, %83 : vector<128x128xf32>
    %c7_i32_28 = arith.constant 7 : i32
    %85 = vector.broadcast %c7_i32_28 : i32 to vector<1x128xi32>
    %86 = arith.muli %14, %85 : vector<1x128xi32>
    %87 = arith.addi %86, %44 : vector<1x128xi32>
    %88 = vector.broadcast %87 : vector<1x128xi32> to vector<49x128xi32>
    %89 = arith.cmpi eq, %68, %88 : vector<49x128xi32>
    %90 = arith.extui %89 : vector<49x128xi1> to vector<49x128xi32>
    %91 = arith.sitofp %90 : vector<49x128xi32> to vector<49x128xf32>
    %c0_29 = arith.constant 0 : index
    %c0_30 = arith.constant 0 : index
    %92 = vector.load %arg3[%c0_29, %c0_30] : memref<128x49xf32, #tpu.memory_space<vmem>>, vector<128x49xf32>
    %cst_31 = arith.constant dense<0.000000e+00> : vector<128x128xf32>
    %93 = tpu.matmul %92, %91, %cst_31 {dimension_numbers = #tpu.dot_dimension_numbers<[1], [0], [0], [1], [0, 0, 1, 1], [], []>} : vector<128x49xf32>, vector<49x128xf32>, vector<128x128xf32> -> vector<128x128xf32>
    %c7_i32_32 = arith.constant 7 : i32
    %94 = vector.broadcast %c7_i32_32 : i32 to vector<1x128xi32>
    %95 = arith.muli %29, %94 : vector<1x128xi32>
    %96 = arith.addi %95, %59 : vector<1x128xi32>
    %97 = vector.broadcast %96 : vector<1x128xi32> to vector<49x128xi32>
    %98 = arith.cmpi eq, %68, %97 : vector<49x128xi32>
    %99 = arith.extui %98 : vector<49x128xi1> to vector<49x128xi32>
    %100 = arith.sitofp %99 : vector<49x128xi32> to vector<49x128xf32>
    %c0_33 = arith.constant 0 : index
    %c0_34 = arith.constant 0 : index
    %101 = vector.load %arg4[%c0_33, %c0_34] : memref<128x49xf32, #tpu.memory_space<vmem>>, vector<128x49xf32>
    %cst_35 = arith.constant dense<0.000000e+00> : vector<128x128xf32>
    %102 = tpu.matmul %101, %100, %cst_35 {dimension_numbers = #tpu.dot_dimension_numbers<[1], [0], [0], [1], [0, 0, 1, 1], [], []>} : vector<128x49xf32>, vector<49x128xf32>, vector<128x128xf32> -> vector<128x128xf32>
    %103 = arith.mulf %93, %102 : vector<128x128xf32>
    %104 = arith.addf %84, %103 : vector<128x128xf32>
    %c7_i32_36 = arith.constant 7 : i32
    %105 = vector.broadcast %c7_i32_36 : i32 to vector<1x128xi32>
    %106 = arith.muli %14, %105 : vector<1x128xi32>
    %107 = arith.addi %106, %59 : vector<1x128xi32>
    %108 = vector.broadcast %107 : vector<1x128xi32> to vector<49x128xi32>
    %109 = arith.cmpi eq, %68, %108 : vector<49x128xi32>
    %110 = arith.extui %109 : vector<49x128xi1> to vector<49x128xi32>
    %111 = arith.sitofp %110 : vector<49x128xi32> to vector<49x128xf32>
    %c0_37 = arith.constant 0 : index
    %c0_38 = arith.constant 0 : index
    %112 = vector.load %arg5[%c0_37, %c0_38] : memref<128x49xf32, #tpu.memory_space<vmem>>, vector<128x49xf32>
    %cst_39 = arith.constant dense<0.000000e+00> : vector<128x128xf32>
    %113 = tpu.matmul %112, %111, %cst_39 {dimension_numbers = #tpu.dot_dimension_numbers<[1], [0], [0], [1], [0, 0, 1, 1], [], []>} : vector<128x49xf32>, vector<49x128xf32>, vector<128x128xf32> -> vector<128x128xf32>
    %c7_i32_40 = arith.constant 7 : i32
    %114 = vector.broadcast %c7_i32_40 : i32 to vector<1x128xi32>
    %115 = arith.muli %29, %114 : vector<1x128xi32>
    %116 = arith.addi %115, %44 : vector<1x128xi32>
    %117 = vector.broadcast %116 : vector<1x128xi32> to vector<49x128xi32>
    %118 = arith.cmpi eq, %68, %117 : vector<49x128xi32>
    %119 = arith.extui %118 : vector<49x128xi1> to vector<49x128xi32>
    %120 = arith.sitofp %119 : vector<49x128xi32> to vector<49x128xf32>
    %c0_41 = arith.constant 0 : index
    %c0_42 = arith.constant 0 : index
    %121 = vector.load %arg6[%c0_41, %c0_42] : memref<128x49xf32, #tpu.memory_space<vmem>>, vector<128x49xf32>
    %cst_43 = arith.constant dense<0.000000e+00> : vector<128x128xf32>
    %122 = tpu.matmul %121, %120, %cst_43 {dimension_numbers = #tpu.dot_dimension_numbers<[1], [0], [0], [1], [0, 0, 1, 1], [], []>} : vector<128x49xf32>, vector<49x128xf32>, vector<128x128xf32> -> vector<128x128xf32>
    %123 = arith.mulf %113, %122 : vector<128x128xf32>
    %124 = arith.addf %104, %123 : vector<128x128xf32>
    %125 = tpu.iota {dimensions = array<i32: 0>} : vector<16x128xi32>
    %c3_i32 = arith.constant 3 : i32
    %126 = vector.broadcast %c3_i32 : i32 to vector<16x128xi32>
    %127 = arith.shrsi %125, %126 : vector<16x128xi32>
    %c1_i32 = arith.constant 1 : i32
    %128 = vector.broadcast %c1_i32 : i32 to vector<16x128xi32>
    %129 = arith.andi %127, %128 : vector<16x128xi32>
    %c1_i32_44 = arith.constant 1 : i32
    %130 = vector.broadcast %c1_i32_44 : i32 to vector<16x128xi32>
    %131 = arith.cmpi eq, %129, %130 : vector<16x128xi32>
    %cst_45 = arith.constant 1.000000e+00 : f32
    %132 = vector.broadcast %cst_45 : f32 to vector<1x128xf32>
    %133 = arith.subf %132, %10 : vector<1x128xf32>
    %134 = vector.shape_cast %10 : vector<1x128xf32> to vector<1x128xf32>
    %135 = vector.broadcast %134 : vector<1x128xf32> to vector<16x128xf32>
    %136 = vector.shape_cast %133 : vector<1x128xf32> to vector<1x128xf32>
    %137 = vector.broadcast %136 : vector<1x128xf32> to vector<16x128xf32>
    %138 = arith.select %131, %135, %137 : vector<16x128xi1>, vector<16x128xf32>
    %c2_i32 = arith.constant 2 : i32
    %139 = vector.broadcast %c2_i32 : i32 to vector<16x128xi32>
    %140 = arith.shrsi %125, %139 : vector<16x128xi32>
    %c1_i32_46 = arith.constant 1 : i32
    %141 = vector.broadcast %c1_i32_46 : i32 to vector<16x128xi32>
    %142 = arith.andi %140, %141 : vector<16x128xi32>
    %c1_i32_47 = arith.constant 1 : i32
    %143 = vector.broadcast %c1_i32_47 : i32 to vector<16x128xi32>
    %144 = arith.cmpi eq, %142, %143 : vector<16x128xi32>
    %cst_48 = arith.constant 1.000000e+00 : f32
    %145 = vector.broadcast %cst_48 : f32 to vector<1x128xf32>
    %146 = arith.subf %145, %25 : vector<1x128xf32>
    %147 = vector.shape_cast %25 : vector<1x128xf32> to vector<1x128xf32>
    %148 = vector.broadcast %147 : vector<1x128xf32> to vector<16x128xf32>
    %149 = vector.shape_cast %146 : vector<1x128xf32> to vector<1x128xf32>
    %150 = vector.broadcast %149 : vector<1x128xf32> to vector<16x128xf32>
    %151 = arith.select %144, %148, %150 : vector<16x128xi1>, vector<16x128xf32>
    %152 = arith.mulf %138, %151 : vector<16x128xf32>
    %c1_i32_49 = arith.constant 1 : i32
    %153 = vector.broadcast %c1_i32_49 : i32 to vector<16x128xi32>
    %154 = arith.shrsi %125, %153 : vector<16x128xi32>
    %c1_i32_50 = arith.constant 1 : i32
    %155 = vector.broadcast %c1_i32_50 : i32 to vector<16x128xi32>
    %156 = arith.andi %154, %155 : vector<16x128xi32>
    %c1_i32_51 = arith.constant 1 : i32
    %157 = vector.broadcast %c1_i32_51 : i32 to vector<16x128xi32>
    %158 = arith.cmpi eq, %156, %157 : vector<16x128xi32>
    %cst_52 = arith.constant 1.000000e+00 : f32
    %159 = vector.broadcast %cst_52 : f32 to vector<1x128xf32>
    %160 = arith.subf %159, %40 : vector<1x128xf32>
    %161 = vector.shape_cast %40 : vector<1x128xf32> to vector<1x128xf32>
    %162 = vector.broadcast %161 : vector<1x128xf32> to vector<16x128xf32>
    %163 = vector.shape_cast %160 : vector<1x128xf32> to vector<1x128xf32>
    %164 = vector.broadcast %163 : vector<1x128xf32> to vector<16x128xf32>
    %165 = arith.select %158, %162, %164 : vector<16x128xi1>, vector<16x128xf32>
    %166 = arith.mulf %152, %165 : vector<16x128xf32>
    %c0_i32_53 = arith.constant 0 : i32
    %167 = vector.broadcast %c0_i32_53 : i32 to vector<16x128xi32>
    %168 = arith.shrsi %125, %167 : vector<16x128xi32>
    %c1_i32_54 = arith.constant 1 : i32
    %169 = vector.broadcast %c1_i32_54 : i32 to vector<16x128xi32>
    %170 = arith.andi %168, %169 : vector<16x128xi32>
    %c1_i32_55 = arith.constant 1 : i32
    %171 = vector.broadcast %c1_i32_55 : i32 to vector<16x128xi32>
    %172 = arith.cmpi eq, %170, %171 : vector<16x128xi32>
    %cst_56 = arith.constant 1.000000e+00 : f32
    %173 = vector.broadcast %cst_56 : f32 to vector<1x128xf32>
    %174 = arith.subf %173, %55 : vector<1x128xf32>
    %175 = vector.shape_cast %55 : vector<1x128xf32> to vector<1x128xf32>
    %176 = vector.broadcast %175 : vector<1x128xf32> to vector<16x128xf32>
    %177 = vector.shape_cast %174 : vector<1x128xf32> to vector<1x128xf32>
    %178 = vector.broadcast %177 : vector<1x128xf32> to vector<16x128xf32>
    %179 = arith.select %172, %176, %178 : vector<16x128xi1>, vector<16x128xf32>
    %180 = arith.mulf %166, %179 : vector<16x128xf32>
    %181 = vector.broadcast %64 : vector<1x128xf32> to vector<16x128xf32>
    %182 = arith.mulf %180, %181 : vector<16x128xf32>
    %183 = vector.shape_cast %124 : vector<128x128xf32> to vector<8x16x128xf32>
    %184 = vector.shape_cast %182 : vector<16x128xf32> to vector<1x16x128xf32>
    %185 = vector.broadcast %184 : vector<1x16x128xf32> to vector<8x16x128xf32>
    %186 = arith.mulf %183, %185 : vector<8x16x128xf32>
    %cst_57 = arith.constant dense<0.000000e+00> : vector<8x128xf32>
    %187 = vector.multi_reduction <add>, %186, %cst_57 [1] : vector<8x16x128xf32> to vector<8x128xf32>
    %c0_58 = arith.constant 0 : index
    %c0_59 = arith.constant 0 : index
    %188 = vector.load %arg8[%c0_58, %c0_59] : memref<8x128xf32, #tpu.memory_space<vmem>>, vector<8x128xf32>
    tpu.vector_store %arg8[%c0_58, %c0_59], %187 {strides = array<i32>} : memref<8x128xf32, #tpu.memory_space<vmem>>, vector<8x128xf32>,
    return
  }
  func.func @transform_0(%arg0: i32) -> (i32, i32) {
    %c0_i32 = arith.constant 0 : i32
    %c0_i32_0 = arith.constant 0 : i32
    %c0_i32_1 = arith.constant 0 : i32
    return %c0_i32, %c0_i32_0 : i32, i32
  }
  func.func @transform_1(%arg0: i32) -> (i32, i32) {
    %c0_i32 = arith.constant 0 : i32
    %c0_i32_0 = arith.constant 0 : i32
    %c0_i32_1 = arith.constant 0 : i32
    return %c0_i32, %c0_i32_0 : i32, i32
  }
  func.func @transform_2(%arg0: i32) -> (i32, i32) {
    %c0_i32 = arith.constant 0 : i32
    %c0_i32_0 = arith.constant 0 : i32
    %c0_i32_1 = arith.constant 0 : i32
    return %c0_i32, %c0_i32_0 : i32, i32
  }
  func.func @transform_3(%arg0: i32) -> (i32, i32) {
    %c0_i32 = arith.constant 0 : i32
    %c0_i32_0 = arith.constant 0 : i32
    %c0_i32_1 = arith.constant 0 : i32
    return %c0_i32, %c0_i32_0 : i32, i32
  }
  func.func @transform_4(%arg0: i32) -> (i32, i32) {
    %c0_i32 = arith.constant 0 : i32
    %c0_i32_0 = arith.constant 0 : i32
    %c0_i32_1 = arith.constant 0 : i32
    return %c0_i32, %c0_i32_0 : i32, i32
  }
  func.func @transform_5(%arg0: i32) -> (i32, i32) {
    %c0_i32 = arith.constant 0 : i32
    %c0_i32_0 = arith.constant 0 : i32
    %c0_i32_1 = arith.constant 0 : i32
    return %c0_i32, %c0_i32_0 : i32, i32
  }
  func.func @transform_6(%arg0: i32) -> (i32, i32) {
    %c0_i32 = arith.constant 0 : i32
    %c0_i32_0 = arith.constant 0 : i32
    return %c0_i32, %arg0 : i32, i32
  }
  func.func @transform_7(%arg0: i32) -> (i32, i32) {
    %c0_i32 = arith.constant 0 : i32
    %c0_i32_0 = arith.constant 0 : i32
    return %c0_i32, %arg0 : i32, i32
  }
}

</mosaic_0001>

<llo_original>
// kernel: tpu_custom_call.1
$region0: #{tpu_custom_call.1}
  #allocation0 [shape = 'u32[]', space=smem, size = 0x4, offset = 0x4, fixed_abs, tag = 'smem constant byte address 0x4 - core index']
  #allocation1 [shape = 'u32[144,128]{1,0:T(1,128)}', space=vmem, size = 0x12000, scoped, tag = 'internal scratch']
  %s0 = inlined_call_operand.vmem [shape: f32[128,49], index: 0, kind: input, shape index: {}]
  %s1 = inlined_call_operand.vmem [shape: f32[128,49], index: 1, kind: input, shape index: {}]
  %s2 = inlined_call_operand.vmem [shape: f32[128,49], index: 2, kind: input, shape index: {}]
  %s3 = inlined_call_operand.vmem [shape: f32[128,49], index: 3, kind: input, shape index: {}]
  %s4 = inlined_call_operand.vmem [shape: f32[128,49], index: 4, kind: input, shape index: {}]
  %s5 = inlined_call_operand.vmem [shape: f32[128,49], index: 5, kind: input, shape index: {}]
  %s6 = inlined_call_operand.vmem [shape: f32[8,128], index: 6, kind: input, shape index: {}]
  %s7 = inlined_call_operand.hbm [shape: f32[8,128], index: 7, kind: output, shape index: {}]
  %s8 = sld [smem:[#allocation0]]
  $region38: #{tpu_custom_call.1} parent=0
    _
  %s10 = ssub.s32 1, %s8
  %s11 = scalar_select 0, %s10, %s8
  $region1: #{tpu_custom_call.1} parent=0
    #allocation2 [shape = 'u8[4096]{0}', space=vmem, size = 0x1000, scoped, tag = 'output window, operand 0, single buffered']
    #allocation3 [shape = 's32[1]{0}', space=sflag, size = 0x4, scoped, tag = 'scoped memory for tpu_custom_call.1']
    %12 = vsyncpa [#allocation3], 0
    // Predicated region
    $region2: #{tpu_custom_call.1} parent=1 // pred_check
      _
    $region3: #{tpu_custom_call.1} parent=1 // pred_check_branch
      %14 = sbr.rel (0) target = $region5
    $region4: #{tpu_custom_call.1} parent=1 // pred_region
      _
    $region5: #{tpu_custom_call.1} parent=1 // pred_fallthru
      _
    // Predicated region
    $region6: #{tpu_custom_call.1} parent=1 // pred_check
      _
    $region7: #{tpu_custom_call.1} parent=1 // pred_check_branch
      %16 = sbr.rel (0) target = $region9
    $region8: #{tpu_custom_call.1} parent=1 // pred_region
      _
    $region9: #{tpu_custom_call.1} parent=1 // pred_fallthru
      _
    // Predicated region
    $region10: #{tpu_custom_call.1} parent=1 // pred_check
      _
    $region11: #{tpu_custom_call.1} parent=1 // pred_check_branch
      %18 = sbr.rel (0) target = $region13
    $region12: #{tpu_custom_call.1} parent=1 // pred_region
      _
    $region13: #{tpu_custom_call.1} parent=1 // pred_fallthru
      _
    // Predicated region
    $region14: #{tpu_custom_call.1} parent=1 // pred_check
      _
    $region15: #{tpu_custom_call.1} parent=1 // pred_check_branch
      %20 = sbr.rel (0) target = $region17
    $region16: #{tpu_custom_call.1} parent=1 // pred_region
      _
    $region17: #{tpu_custom_call.1} parent=1 // pred_fallthru
      _
    // Predicated region
    $region18: #{tpu_custom_call.1} parent=1 // pred_check
      _
    $region19: #{tpu_custom_call.1} parent=1 // pred_check_branch
      %22 = sbr.rel (0) target = $region21
    $region20: #{tpu_custom_call.1} parent=1 // pred_region
      _
    $region21: #{tpu_custom_call.1} parent=1 // pred_fallthru
      _
    // Predicated region
    $region22: #{tpu_custom_call.1} parent=1 // pred_check
      _
    $region23: #{tpu_custom_call.1} parent=1 // pred_check_branch
      %24 = sbr.rel (0) target = $region25
    $region24: #{tpu_custom_call.1} parent=1 // pred_region
      _
    $region25: #{tpu_custom_call.1} parent=1 // pred_fallthru
      _
    // Predicated region
    $region26: #{tpu_custom_call.1} parent=1 // pred_check
      _
    $region27: #{tpu_custom_call.1} parent=1 // pred_check_branch
      %26 = sbr.rel (0) target = $region29
    $region28: #{tpu_custom_call.1} parent=1 // pred_region
      _
    $region29: #{tpu_custom_call.1} parent=1 // pred_fallthru
      _
    %v27 = vld [vmem:[%s6] sm:$0x1]
    %vm28 = vcmp.ge.f32.partialorder %v27, 0.0
    %vm29 = vcmp.lt.f32.partialorder %v27, 1.0
    %vm30 = vmand %vm28, %vm29
    %v31 = vmul.f32 %v27, 7.0
    %v32 = vcvt.f32.s32.to.zero.pseudo %v31
    %v33 = vcvt.s32.f32 %v32
    %v34 = vsub.f32 %v31, %v33
    %vm35 = vcmp.gt.s32.totalorder %v32, 0
    %v36 = vsel %vm35, %v32, 0
    %vm37 = vcmp.lt.s32.totalorder %v36, 6
    %v38 = vsel %vm37, %v36, 6
    %v39 = vld [vmem:[%s6 + $0x1] sm:$0x1]
    %vm40 = vcmp.ge.f32.partialorder %v39, 0.0
    %vm41 = vcmp.lt.f32.partialorder %v39, 1.0
    %vm42 = vmand %vm40, %vm41
    %v43 = vmul.f32 %v39, 7.0
    %v44 = vcvt.f32.s32.to.zero.pseudo %v43
    %v45 = vcvt.s32.f32 %v44
    %v46 = vsub.f32 %v43, %v45
    %vm47 = vcmp.gt.s32.totalorder %v44, 0
    %v48 = vsel %vm47, %v44, 0
    %vm49 = vcmp.lt.s32.totalorder %v48, 6
    %v50 = vsel %vm49, %v48, 6
    %v51 = vld [vmem:[%s6 + $0x2] sm:$0x1]
    %vm52 = vcmp.ge.f32.partialorder %v51, 0.0
    %vm53 = vcmp.lt.f32.partialorder %v51, 1.0
    %vm54 = vmand %vm52, %vm53
    %v55 = vmul.f32 %v51, 7.0
    %v56 = vcvt.f32.s32.to.zero.pseudo %v55
    %v57 = vcvt.s32.f32 %v56
    %v58 = vsub.f32 %v55, %v57
    %vm59 = vcmp.gt.s32.totalorder %v56, 0
    %v60 = vsel %vm59, %v56, 0
    %vm61 = vcmp.lt.s32.totalorder %v60, 6
    %v62 = vsel %vm61, %v60, 6
    %v63 = vld [vmem:[%s6 + $0x3] sm:$0x1]
    %vm64 = vcmp.ge.f32.partialorder %v63, 0.0
    %vm65 = vcmp.lt.f32.partialorder %v63, 1.0
    %vm66 = vmand %vm64, %vm65
    %v67 = vmul.f32 %v63, 7.0
    %v68 = vcvt.f32.s32.to.zero.pseudo %v67
    %v69 = vcvt.s32.f32 %v68
    %v70 = vsub.f32 %v67, %v69
    %vm71 = vcmp.gt.s32.totalorder %v68, 0
    %v72 = vsel %vm71, %v68, 0
    %vm73 = vcmp.lt.s32.totalorder %v72, 6
    %v74 = vsel %vm73, %v72, 6
    %vm75 = vmand %vm30, %vm42
    %vm76 = vmand %vm75, %vm54
    %vm77 = vmand %vm76, %vm66
    %v78 = vsel %vm77, 1, 0
    %v79 = vcvt.s32.f32 %v78
    %v80 = vmul.u32 %v38, 7
    %v81 = vadd.s32 %v80, %v50
    %v82 = vlaneseq
    %v83 = vshrl.u32 %v82, 7
    %v84 = vadd.s32 %v83, 8
    %v85 = vadd.s32 %v83, 16
    %v86 = vadd.s32 %v83, 24
    %v87 = vadd.s32 %v83, 32
    %v88 = vadd.s32 %v83, 40
    %v89 = vadd.s32 %v83, 48
    %v90 = vlaneseq
    %v91 = vshrl.u32 %v90, 7
    %v92 = vsub.s32 0, %v91
    %v93 = vrot.slane %v81, %v92
    %vm94 = vcmp.eq.s32.totalorder %v83, %v93
    %vm95 = vcmp.eq.s32.totalorder %v84, %v93
    %vm96 = vcmp.eq.s32.totalorder %v85, %v93
    %vm97 = vcmp.eq.s32.totalorder %v86, %v93
    %vm98 = vcmp.eq.s32.totalorder %v87, %v93
    %vm99 = vcmp.eq.s32.totalorder %v88, %v93
    %vm100 = vcmp.eq.s32.totalorder %v89, %v93
    %v101 = vsel %vm94, 1, 0
    %v102 = vsel %vm95, 1, 0
    %v103 = vsel %vm96, 1, 0
    %v104 = vsel %vm97, 1, 0
    %v105 = vsel %vm98, 1, 0
    %v106 = vsel %vm99, 1, 0
    %v107 = vsel %vm100, 1, 0
    %v108 = vcvt.s32.f32 %v101
    %v109 = vcvt.s32.f32 %v102
    %v110 = vcvt.s32.f32 %v103
    %v111 = vcvt.s32.f32 %v104
    %v112 = vcvt.s32.f32 %v105
    %v113 = vcvt.s32.f32 %v106
    %v114 = vcvt.s32.f32 %v107
    %v115 = vld [vmem:[%s0] sm:$0xff]
    %v116 = vld [vmem:[%s0 + $0x8] sm:$0xff]
    %v117 = vld [vmem:[%s0 + $0x10] sm:$0xff]
    %v118 = vld [vmem:[%s0 + $0x18] sm:$0xff]
    %v119 = vld [vmem:[%s0 + $0x20] sm:$0xff]
    %v120 = vld [vmem:[%s0 + $0x28] sm:$0xff]
    %v121 = vld [vmem:[%s0 + $0x30] sm:$0xff]
    %v122 = vld [vmem:[%s0 + $0x38] sm:$0xff]
    %v123 = vld [vmem:[%s0 + $0x40] sm:$0xff]
    %v124 = vld [vmem:[%s0 + $0x48] sm:$0xff]
    %v125 = vld [vmem:[%s0 + $0x50] sm:$0xff]
    %v126 = vld [vmem:[%s0 + $0x58] sm:$0xff]
    %v127 = vld [vmem:[%s0 + $0x60] sm:$0xff]
    %v128 = vld [vmem:[%s0 + $0x68] sm:$0xff]
    %v129 = vld [vmem:[%s0 + $0x70] sm:$0xff]
    %v130 = vld [vmem:[%s0 + $0x78] sm:$0xff]
    %vm131 = vcmask 400384
    %v133 = vsel %vm131, %v115, 0
    %v136 = vsel %vm131, %v116, 0
    %v139 = vsel %vm131, %v117, 0
    %v142 = vsel %vm131, %v118, 0
    %v145 = vsel %vm131, %v119, 0
    %v148 = vsel %vm131, %v120, 0
    %v151 = vsel %vm131, %v121, 0
    %v154 = vsel %vm131, %v122, 0
    %v157 = vsel %vm131, %v123, 0
    %v160 = vsel %vm131, %v124, 0
    %v163 = vsel %vm131, %v125, 0
    %v166 = vsel %vm131, %v126, 0
    %v169 = vsel %vm131, %v127, 0
    %v172 = vsel %vm131, %v128, 0
    %v175 = vsel %vm131, %v129, 0
    %v178 = vsel %vm131, %v130, 0
    %vm180 = vcmask 1040384
    %v182 = vsel %vm180, %v114, 0
    %184 = vmatprep.subr.mxu0 0.0
    %185 = vmatpush1.msra.mxu0 %v108
    %186 = vmatprep.subr.mxu0 0.0
    %187 = vmatpush1.msra.mxu0 %v109
    %188 = vmatprep.subr.mxu0 0.0
    %189 = vmatpush1.msra.mxu0 %v110
    %190 = vmatprep.subr.mxu0 0.0
    %191 = vmatpush1.msra.mxu0 %v111
    %192 = vmatprep.subr.mxu0 0.0
    %193 = vmatpush1.msra.mxu0 %v112
    %194 = vmatprep.subr.mxu0 0.0
    %195 = vmatpush1.msra.mxu0 %v113
    %196 = vmatprep.subr.mxu0 0.0
    %197 = vmatpush1.msra.mxu0 %v182
    %198 = vmatprep.subr.mxu0 0.0
    %199 = vmatpush1.msra.mxu0 0.0
    %200 = vmatprep.subr.mxu0 0.0
    %201 = vmatpush1.msra.mxu0 0.0
    %202 = vmatprep.subr.mxu0 0.0
    %203 = vmatpush1.msra.mxu0 0.0
    %204 = vmatprep.subr.mxu0 0.0
    %205 = vmatpush1.msra.mxu0 0.0
    %206 = vmatprep.subr.mxu0 0.0
    %207 = vmatpush1.msra.mxu0 0.0
    %208 = vmatprep.subr.mxu0 0.0
    %209 = vmatpush1.msra.mxu0 0.0
    %210 = vmatprep.subr.mxu0 0.0
    %211 = vmatpush1.msra.mxu0 0.0
    %212 = vmatprep.subr.mxu0 0.0
    %213 = vmatpush1.msra.mxu0 0.0
    %214 = vmatprep.subr.mxu0 0.0
    %215 = vmatpush1.msra.mxu0 0.0
    %216 = vmatprep.subr.mxu0 0.0
    %217 = vmatpush1.msra.mxu0 0.0
    %218 = vmatprep.subr.mxu0 0.0
    %219 = vmatpush1.msra.mxu0 0.0
    %220 = vmatprep.subr.mxu0 0.0
    %221 = vmatpush1.msra.mxu0 0.0
    %222 = vmatprep.subr.mxu0 0.0
    %223 = vmatpush1.msra.mxu0 0.0
    %224 = vmatprep.subr.mxu0 0.0
    %225 = vmatpush1.msra.mxu0 0.0
    %226 = vmatprep.subr.mxu0 0.0
    %227 = vmatpush1.msra.mxu0 0.0
    %228 = vmatprep.subr.mxu0 0.0
    %229 = vmatpush1.msra.mxu0 0.0
    %230 = vmatprep.subr.mxu0 0.0
    %231 = vmatpush1.msra.mxu0 0.0
    %232 = vmatprep.subr.mxu0 0.0
    %233 = vmatpush1.msra.mxu0 0.0
    %234 = vmatprep.subr.mxu0 0.0
    %235 = vmatpush1.msra.mxu0 0.0
    %236 = vmatprep.subr.mxu0 0.0
    %237 = vmatpush1.msra.mxu0 0.0
    %238 = vmatprep.subr.mxu0 0.0
    %239 = vmatpush1.msra.mxu0 0.0
    %240 = vmatprep.subr.mxu0 0.0
    %241 = vmatpush1.msra.mxu0 0.0
    %242 = vmatprep.subr.mxu0 0.0
    %243 = vmatpush1.msra.mxu0 0.0
    %244 = vmatprep.subr.mxu0 0.0
    %245 = vmatpush1.msra.mxu0 0.0
    %246 = vmatprep.subr.mxu0 0.0
    %247 = vmatpush1.msra.mxu0 0.0
    %248 = vmatprep.mubr.f32.mxu0 0.0
    %249 = vmatmul.mubr.f32.gmra.mrb[0].mxu0 %v133
    %v250 = vpop.f32.mrb[0].mxu0
    %v251 = vadd.f32 0.0, %v250
    %v252 = vpop.f32.mrb[0].mxu0
    %253 = vmatprep.mubr.f32.mxu0 0.0
    %254 = vmatmul.mubr.f32.gmra.mrb[0].mxu0 %v136
    %v255 = vpop.f32.mrb[0].mxu0
    %v256 = vadd.f32 0.0, %v255
    %v257 = vpop.f32.mrb[0].mxu0
    %258 = vmatprep.mubr.f32.mxu0 0.0
    %259 = vmatmul.mubr.f32.gmra.mrb[0].mxu0 %v139
    %v260 = vpop.f32.mrb[0].mxu0
    %v261 = vadd.f32 0.0, %v260
    %v262 = vpop.f32.mrb[0].mxu0
    %263 = vmatprep.mubr.f32.mxu0 0.0
    %264 = vmatmul.mubr.f32.gmra.mrb[0].mxu0 %v142
    %v265 = vpop.f32.mrb[0].mxu0
    %v266 = vadd.f32 0.0, %v265
    %v267 = vpop.f32.mrb[0].mxu0
    %268 = vmatprep.mubr.f32.mxu0 0.0
    %269 = vmatmul.mubr.f32.gmra.mrb[0].mxu0 %v145
    %v270 = vpop.f32.mrb[0].mxu0
    %v271 = vadd.f32 0.0, %v270
    %v272 = vpop.f32.mrb[0].mxu0
    %273 = vmatprep.mubr.f32.mxu0 0.0
    %274 = vmatmul.mubr.f32.gmra.mrb[0].mxu0 %v148
    %v275 = vpop.f32.mrb[0].mxu0
    %v276 = vadd.f32 0.0, %v275
    %v277 = vpop.f32.mrb[0].mxu0
    %278 = vmatprep.mubr.f32.mxu0 0.0
    %279 = vmatmul.mubr.f32.gmra.mrb[0].mxu0 %v151
    %v280 = vpop.f32.mrb[0].mxu0
    %v281 = vadd.f32 0.0, %v280
    %v282 = vpop.f32.mrb[0].mxu0
    %283 = vmatprep.mubr.f32.mxu0 0.0
    %284 = vmatmul.mubr.f32.gmra.mrb[0].mxu0 %v154
    %v285 = vpop.f32.mrb[0].mxu0
    %v286 = vadd.f32 0.0, %v285
    %v287 = vpop.f32.mrb[0].mxu0
    %288 = vmatprep.mubr.f32.mxu0 0.0
    %289 = vmatmul.mubr.f32.gmra.mrb[0].mxu0 %v157
    %v290 = vpop.f32.mrb[0].mxu0
    %v291 = vadd.f32 0.0, %v290
    %v292 = vpop.f32.mrb[0].mxu0
    %293 = vmatprep.mubr.f32.mxu0 0.0
    %294 = vmatmul.mubr.f32.gmra.mrb[0].mxu0 %v160
    %v295 = vpop.f32.mrb[0].mxu0
    %v296 = vadd.f32 0.0, %v295
    %v297 = vpop.f32.mrb[0].mxu0
    %298 = vmatprep.mubr.f32.mxu0 0.0
    %299 = vmatmul.mubr.f32.gmra.mrb[0].mxu0 %v163
    %v300 = vpop.f32.mrb[0].mxu0
    %v301 = vadd.f32 0.0, %v300
    %v302 = vpop.f32.mrb[0].mxu0
    %303 = vmatprep.mubr.f32.mxu0 0.0
    %304 = vmatmul.mubr.f32.gmra.mrb[0].mxu0 %v166
    %v305 = vpop.f32.mrb[0].mxu0
    %v306 = vadd.f32 0.0, %v305
    %v307 = vpop.f32.mrb[0].mxu0
    %308 = vmatprep.mubr.f32.mxu0 0.0
    %309 = vmatmul.mubr.f32.gmra.mrb[0].mxu0 %v169
    %v310 = vpop.f32.mrb[0].mxu0
    %v311 = vadd.f32 0.0, %v310
    %v312 = vpop.f32.mrb[0].mxu0
    %313 = vmatprep.mubr.f32.mxu0 0.0
    %314 = vmatmul.mubr.f32.gmra.mrb[0].mxu0 %v172
    %v315 = vpop.f32.mrb[0].mxu0
    %v316 = vadd.f32 0.0, %v315
    %v317 = vpop.f32.mrb[0].mxu0
    %318 = vmatprep.mubr.f32.mxu0 0.0
    %319 = vmatmul.mubr.f32.gmra.mrb[0].mxu0 %v175
    %v320 = vpop.f32.mrb[0].mxu0
    %v321 = vadd.f32 0.0, %v320
    %v322 = vpop.f32.mrb[0].mxu0
    %323 = vmatprep.mubr.f32.mxu0 0.0
    %324 = vmatmul.mubr.f32.gmra.mrb[0].mxu0 %v178
    %v325 = vpop.f32.mrb[0].mxu0
    %v326 = vadd.f32 0.0, %v325
    %v327 = vpop.f32.mrb[0].mxu0
    %328 = vdwg.mxu0
    %v329 = vmul.u32 %v62, 7
    %v330 = vadd.s32 %v329, %v74
    %v331 = vlaneseq
    %v332 = vshrl.u32 %v331, 7
    %v333 = vsub.s32 0, %v332
    %v334 = vrot.slane %v330, %v333
    %vm335 = vcmp.eq.s32.totalorder %v83, %v334
    %vm336 = vcmp.eq.s32.totalorder %v84, %v334
    %vm337 = vcmp.eq.s32.totalorder %v85, %v334
    %vm338 = vcmp.eq.s32.totalorder %v86, %v334
    %vm339 = vcmp.eq.s32.totalorder %v87, %v334
    %vm340 = vcmp.eq.s32.totalorder %v88, %v334
    %vm341 = vcmp.eq.s32.totalorder %v89, %v334
    %v342 = vsel %vm335, 1, 0
    %v343 = vsel %vm336, 1, 0
    %v344 = vsel %vm337, 1, 0
    %v345 = vsel %vm338, 1, 0
    %v346 = vsel %vm339, 1, 0
    %v347 = vsel %vm340, 1, 0
    %v348 = vsel %vm341, 1, 0
    %v349 = vcvt.s32.f32 %v342
    %v350 = vcvt.s32.f32 %v343
    %v351 = vcvt.s32.f32 %v344
    %v352 = vcvt.s32.f32 %v345
    %v353 = vcvt.s32.f32 %v346
    %v354 = vcvt.s32.f32 %v347
    %v355 = vcvt.s32.f32 %v348
    %v356 = vld [vmem:[%s1] sm:$0xff]
    %v357 = vld [vmem:[%s1 + $0x8] sm:$0xff]
    %v358 = vld [vmem:[%s1 + $0x10] sm:$0xff]
    %v359 = vld [vmem:[%s1 + $0x18] sm:$0xff]
    %v360 = vld [vmem:[%s1 + $0x20] sm:$0xff]
    %v361 = vld [vmem:[%s1 + $0x28] sm:$0xff]
    %v362 = vld [vmem:[%s1 + $0x30] sm:$0xff]
    %v363 = vld [vmem:[%s1 + $0x38] sm:$0xff]
    %v364 = vld [vmem:[%s1 + $0x40] sm:$0xff]
    %v365 = vld [vmem:[%s1 + $0x48] sm:$0xff]
    %v366 = vld [vmem:[%s1 + $0x50] sm:$0xff]
    %v367 = vld [vmem:[%s1 + $0x58] sm:$0xff]
    %v368 = vld [vmem:[%s1 + $0x60] sm:$0xff]
    %v369 = vld [vmem:[%s1 + $0x68] sm:$0xff]
    %v370 = vld [vmem:[%s1 + $0x70] sm:$0xff]
    %v371 = vld [vmem:[%s1 + $0x78] sm:$0xff]
    %v373 = vsel %vm131, %v356, 0
    %v376 = vsel %vm131, %v357, 0
    %v379 = vsel %vm131, %v358, 0
    %v382 = vsel %vm131, %v359, 0
    %v385 = vsel %vm131, %v360, 0
    %v388 = vsel %vm131, %v361, 0
    %v391 = vsel %vm131, %v362, 0
    %v394 = vsel %vm131, %v363, 0
    %v397 = vsel %vm131, %v364, 0
    %v400 = vsel %vm131, %v365, 0
    %v403 = vsel %vm131, %v366, 0
    %v406 = vsel %vm131, %v367, 0
    %v409 = vsel %vm131, %v368, 0
    %v412 = vsel %vm131, %v369, 0
    %v415 = vsel %vm131, %v370, 0
    %v418 = vsel %vm131, %v371, 0
    %v421 = vsel %vm180, %v355, 0
    %423 = vmatprep.subr.mxu0 0.0
    %424 = vmatpush1.msra.mxu0 %v349
    %425 = vmatprep.subr.mxu0 0.0
    %426 = vmatpush1.msra.mxu0 %v350
    %427 = vmatprep.subr.mxu0 0.0
    %428 = vmatpush1.msra.mxu0 %v351
    %429 = vmatprep.subr.mxu0 0.0
    %430 = vmatpush1.msra.mxu0 %v352
    %431 = vmatprep.subr.mxu0 0.0
    %432 = vmatpush1.msra.mxu0 %v353
    %433 = vmatprep.subr.mxu0 0.0
    %434 = vmatpush1.msra.mxu0 %v354
    %435 = vmatprep.subr.mxu0 0.0
    %436 = vmatpush1.msra.mxu0 %v421
    %437 = vmatprep.subr.mxu0 0.0
    %438 = vmatpush1.msra.mxu0 0.0
    %439 = vmatprep.subr.mxu0 0.0
    %440 = vmatpush1.msra.mxu0 0.0
    %441 = vmatprep.subr.mxu0 0.0
    %442 = vmatpush1.msra.mxu0 0.0
    %443 = vmatprep.subr.mxu0 0.0
    %444 = vmatpush1.msra.mxu0 0.0
    %445 = vmatprep.subr.mxu0 0.0
    %446 = vmatpush1.msra.mxu0 0.0
    %447 = vmatprep.subr.mxu0 0.0
    %448 = vmatpush1.msra.mxu0 0.0
    %449 = vmatprep.subr.mxu0 0.0
    %450 = vmatpush1.msra.mxu0 0.0
    %451 = vmatprep.subr.mxu0 0.0
    %452 = vmatpush1.msra.mxu0 0.0
    %453 = vmatprep.subr.mxu0 0.0
    %454 = vmatpush1.msra.mxu0 0.0
    %455 = vmatprep.subr.mxu0 0.0
    %456 = vmatpush1.msra.mxu0 0.0
    %457 = vmatprep.subr.mxu0 0.0
    %458 = vmatpush1.msra.mxu0 0.0
    %459 = vmatprep.subr.mxu0 0.0
    %460 = vmatpush1.msra.mxu0 0.0
    %461 = vmatprep.subr.mxu0 0.0
    %462 = vmatpush1.msra.mxu0 0.0
    %463 = vmatprep.subr.mxu0 0.0
    %464 = vmatpush1.msra.mxu0 0.0
    %465 = vmatprep.subr.mxu0 0.0
    %466 = vmatpush1.msra.mxu0 0.0
    %467 = vmatprep.subr.mxu0 0.0
    %468 = vmatpush1.msra.mxu0 0.0
    %469 = vmatprep.subr.mxu0 0.0
    %470 = vmatpush1.msra.mxu0 0.0
    %471 = vmatprep.subr.mxu0 0.0
    %472 = vmatpush1.msra.mxu0 0.0
    %473 = vmatprep.subr.mxu0 0.0
    %474 = vmatpush1.msra.mxu0 0.0
    %475 = vmatprep.subr.mxu0 0.0
    %476 = vmatpush1.msra.mxu0 0.0
    %477 = vmatprep.subr.mxu0 0.0
    %478 = vmatpush1.msra.mxu0 0.0
    %479 = vmatprep.subr.mxu0 0.0
    %480 = vmatpush1.msra.mxu0 0.0
    %481 = vmatprep.subr.mxu0 0.0
    %482 = vmatpush1.msra.mxu0 0.0
    %483 = vmatprep.subr.mxu0 0.0
    %484 = vmatpush1.msra.mxu0 0.0
    %485 = vmatprep.subr.mxu0 0.0
    %486 = vmatpush1.msra.mxu0 0.0
    %487 = vmatprep.mubr.f32.mxu0 0.0
    %488 = vmatmul.mubr.f32.gmra.mrb[0].mxu0 %v373
    %v489 = vpop.f32.mrb[0].mxu0
    %v490 = vadd.f32 0.0, %v489
    %v491 = vpop.f32.mrb[0].mxu0
    %492 = vmatprep.mubr.f32.mxu0 0.0
    %493 = vmatmul.mubr.f32.gmra.mrb[0].mxu0 %v376
    %v494 = vpop.f32.mrb[0].mxu0
    %v495 = vadd.f32 0.0, %v494
    %v496 = vpop.f32.mrb[0].mxu0
    %497 = vmatprep.mubr.f32.mxu0 0.0
    %498 = vmatmul.mubr.f32.gmra.mrb[0].mxu0 %v379
    %v499 = vpop.f32.mrb[0].mxu0
    %v500 = vadd.f32 0.0, %v499
    %v501 = vpop.f32.mrb[0].mxu0
    %502 = vmatprep.mubr.f32.mxu0 0.0
    %503 = vmatmul.mubr.f32.gmra.mrb[0].mxu0 %v382
    %v504 = vpop.f32.mrb[0].mxu0
    %v505 = vadd.f32 0.0, %v504
    %v506 = vpop.f32.mrb[0].mxu0
    %507 = vmatprep.mubr.f32.mxu0 0.0
    %508 = vmatmul.mubr.f32.gmra.mrb[0].mxu0 %v385
    %v509 = vpop.f32.mrb[0].mxu0
    %v510 = vadd.f32 0.0, %v509
    %v511 = vpop.f32.mrb[0].mxu0
    %512 = vmatprep.mubr.f32.mxu0 0.0
    %513 = vmatmul.mubr.f32.gmra.mrb[0].mxu0 %v388
    %v514 = vpop.f32.mrb[0].mxu0
    %v515 = vadd.f32 0.0, %v514
    %v516 = vpop.f32.mrb[0].mxu0
    %517 = vmatprep.mubr.f32.mxu0 0.0
    %518 = vmatmul.mubr.f32.gmra.mrb[0].mxu0 %v391
    %v519 = vpop.f32.mrb[0].mxu0
    %v520 = vadd.f32 0.0, %v519
    %v521 = vpop.f32.mrb[0].mxu0
    %522 = vmatprep.mubr.f32.mxu0 0.0
    %523 = vmatmul.mubr.f32.gmra.mrb[0].mxu0 %v394
    %v524 = vpop.f32.mrb[0].mxu0
    %v525 = vadd.f32 0.0, %v524
    %v526 = vpop.f32.mrb[0].mxu0
    %527 = vmatprep.mubr.f32.mxu0 0.0
    %528 = vmatmul.mubr.f32.gmra.mrb[0].mxu0 %v397
    %v529 = vpop.f32.mrb[0].mxu0
    %v530 = vadd.f32 0.0, %v529
    %v531 = vpop.f32.mrb[0].mxu0
    %532 = vmatprep.mubr.f32.mxu0 0.0
    %533 = vmatmul.mubr.f32.gmra.mrb[0].mxu0 %v400
    %v534 = vpop.f32.mrb[0].mxu0
    %v535 = vadd.f32 0.0, %v534
    %v536 = vpop.f32.mrb[0].mxu0
    %537 = vmatprep.mubr.f32.mxu0 0.0
    %538 = vmatmul.mubr.f32.gmra.mrb[0].mxu0 %v403
    %v539 = vpop.f32.mrb[0].mxu0
    %v540 = vadd.f32 0.0, %v539
    %v541 = vpop.f32.mrb[0].mxu0
    %542 = vmatprep.mubr.f32.mxu0 0.0
    %543 = vmatmul.mubr.f32.gmra.mrb[0].mxu0 %v406
    %v544 = vpop.f32.mrb[0].mxu0
    %v545 = vadd.f32 0.0, %v544
    %v546 = vpop.f32.mrb[0].mxu0
    %547 = vmatprep.mubr.f32.mxu0 0.0
    %548 = vmatmul.mubr.f32.gmra.mrb[0].mxu0 %v409
    %v549 = vpop.f32.mrb[0].mxu0
    %v550 = vadd.f32 0.0, %v549
    %v551 = vpop.f32.mrb[0].mxu0
    %552 = vmatprep.mubr.f32.mxu0 0.0
    %553 = vmatmul.mubr.f32.gmra.mrb[0].mxu0 %v412
    %v554 = vpop.f32.mrb[0].mxu0
    %v555 = vadd.f32 0.0, %v554
    %v556 = vpop.f32.mrb[0].mxu0
    %557 = vmatprep.mubr.f32.mxu0 0.0
    %558 = vmatmul.mubr.f32.gmra.mrb[0].mxu0 %v415
    %v559 = vpop.f32.mrb[0].mxu0
    %v560 = vadd.f32 0.0, %v559
    %v561 = vpop.f32.mrb[0].mxu0
    %562 = vmatprep.mubr.f32.mxu0 0.0
    %563 = vmatmul.mubr.f32.gmra.mrb[0].mxu0 %v418
    %v564 = vpop.f32.mrb[0].mxu0
    %v565 = vadd.f32 0.0, %v564
    %v566 = vpop.f32.mrb[0].mxu0
    %567 = vdwg.mxu0
    %v568 = vmul.f32 %v251, %v490
    %v569 = vmul.f32 %v256, %v495
    %v570 = vmul.f32 %v261, %v500
    %v571 = vmul.f32 %v266, %v505
    %v572 = vmul.f32 %v271, %v510
    %v573 = vmul.f32 %v276, %v515
    %v574 = vmul.f32 %v281, %v520
    %v575 = vmul.f32 %v286, %v525
    %v576 = vmul.f32 %v291, %v530
    %v577 = vmul.f32 %v296, %v535
    %v578 = vmul.f32 %v301, %v540
    %v579 = vmul.f32 %v306, %v545
    %v580 = vmul.f32 %v311, %v550
    %v581 = vmul.f32 %v316, %v555
    %v582 = vmul.f32 %v321, %v560
    %v583 = vmul.f32 %v326, %v565
    %v584 = vadd.s32 %v80, %v62
    %v585 = vlaneseq
    %v586 = vshrl.u32 %v585, 7
    %v587 = vsub.s32 0, %v586
    %v588 = vrot.slane %v584, %v587
    %vm589 = vcmp.eq.s32.totalorder %v83, %v588
    %vm590 = vcmp.eq.s32.totalorder %v84, %v588
    %vm591 = vcmp.eq.s32.totalorder %v85, %v588
    %vm592 = vcmp.eq.s32.totalorder %v86, %v588
    %vm593 = vcmp.eq.s32.totalorder %v87, %v588
    %vm594 = vcmp.eq.s32.totalorder %v88, %v588
    %vm595 = vcmp.eq.s32.totalorder %v89, %v588
    %v596 = vsel %vm589, 1, 0
    %v597 = vsel %vm590, 1, 0
    %v598 = vsel %vm591, 1, 0
    %v599 = vsel %vm592, 1, 0
    %v600 = vsel %vm593, 1, 0
    %v601 = vsel %vm594, 1, 0
    %v602 = vsel %vm595, 1, 0
    %v603 = vcvt.s32.f32 %v596
    %v604 = vcvt.s32.f32 %v597
    %v605 = vcvt.s32.f32 %v598
    %v606 = vcvt.s32.f32 %v599
    %v607 = vcvt.s32.f32 %v600
    %v608 = vcvt.s32.f32 %v601
    %v609 = vcvt.s32.f32 %v602
    %v610 = vld [vmem:[%s2] sm:$0xff]
    %v611 = vld [vmem:[%s2 + $0x8] sm:$0xff]
    %v612 = vld [vmem:[%s2 + $0x10] sm:$0xff]
    %v613 = vld [vmem:[%s2 + $0x18] sm:$0xff]
    %v614 = vld [vmem:[%s2 + $0x20] sm:$0xff]
    %v615 = vld [vmem:[%s2 + $0x28] sm:$0xff]
    %v616 = vld [vmem:[%s2 + $0x30] sm:$0xff]
    %v617 = vld [vmem:[%s2 + $0x38] sm:$0xff]
    %v618 = vld [vmem:[%s2 + $0x40] sm:$0xff]
    %v619 = vld [vmem:[%s2 + $0x48] sm:$0xff]
    %v620 = vld [vmem:[%s2 + $0x50] sm:$0xff]
    %v621 = vld [vmem:[%s2 + $0x58] sm:$0xff]
    %v622 = vld [vmem:[%s2 + $0x60] sm:$0xff]
    %v623 = vld [vmem:[%s2 + $0x68] sm:$0xff]
    %v624 = vld [vmem:[%s2 + $0x70] sm:$0xff]
    %v625 = vld [vmem:[%s2 + $0x78] sm:$0xff]
    %v627 = vsel %vm131, %v610, 0
    %v630 = vsel %vm131, %v611, 0
    %v633 = vsel %vm131, %v612, 0
    %v636 = vsel %vm131, %v613, 0
    %v639 = vsel %vm131, %v614, 0
    %v642 = vsel %vm131, %v615, 0
    %v645 = vsel %vm131, %v616, 0
    %v648 = vsel %vm131, %v617, 0
    %v651 = vsel %vm131, %v618, 0
    %v654 = vsel %vm131, %v619, 0
    %v657 = vsel %vm131, %v620, 0
    %v660 = vsel %vm131, %v621, 0
    %v663 = vsel %vm131, %v622, 0
    %v666 = vsel %vm131, %v623, 0
    %v669 = vsel %vm131, %v624, 0
    %v672 = vsel %vm131, %v625, 0
    %v675 = vsel %vm180, %v609, 0
    %677 = vmatprep.subr.mxu0 0.0
    %678 = vmatpush1.msra.mxu0 %v603
    %679 = vmatprep.subr.mxu0 0.0
    %680 = vmatpush1.msra.mxu0 %v604
    %681 = vmatprep.subr.mxu0 0.0
    %682 = vmatpush1.msra.mxu0 %v605
    %683 = vmatprep.subr.mxu0 0.0
    %684 = vmatpush1.msra.mxu0 %v606
    %685 = vmatprep.subr.mxu0 0.0
    %686 = vmatpush1.msra.mxu0 %v607
    %687 = vmatprep.subr.mxu0 0.0
    %688 = vmatpush1.msra.mxu0 %v608
    %689 = vmatprep.subr.mxu0 0.0
    %690 = vmatpush1.msra.mxu0 %v675
    %691 = vmatprep.subr.mxu0 0.0
    %692 = vmatpush1.msra.mxu0 0.0
    %693 = vmatprep.subr.mxu0 0.0
    %694 = vmatpush1.msra.mxu0 0.0
    %695 = vmatprep.subr.mxu0 0.0
    %696 = vmatpush1.msra.mxu0 0.0
    %697 = vmatprep.subr.mxu0 0.0
    %698 = vmatpush1.msra.mxu0 0.0
    %699 = vmatprep.subr.mxu0 0.0
    %700 = vmatpush1.msra.mxu0 0.0
    %701 = vmatprep.subr.mxu0 0.0
    %702 = vmatpush1.msra.mxu0 0.0
    %703 = vmatprep.subr.mxu0 0.0
    %704 = vmatpush1.msra.mxu0 0.0
    %705 = vmatprep.subr.mxu0 0.0
    %706 = vmatpush1.msra.mxu0 0.0
    %707 = vmatprep.subr.mxu0 0.0
    %708 = vmatpush1.msra.mxu0 0.0
    %709 = vmatprep.subr.mxu0 0.0
    %710 = vmatpush1.msra.mxu0 0.0
    %711 = vmatprep.subr.mxu0 0.0
    %712 = vmatpush1.msra.mxu0 0.0
    %713 = vmatprep.subr.mxu0 0.0
    %714 = vmatpush1.msra.mxu0 0.0
    %715 = vmatprep.subr.mxu0 0.0
    %716 = vmatpush1.msra.mxu0 0.0
    %717 = vmatprep.subr.mxu0 0.0
    %718 = vmatpush1.msra.mxu0 0.0
    %719 = vmatprep.subr.mxu0 0.0
    %720 = vmatpush1.msra.mxu0 0.0
    %721 = vmatprep.subr.mxu0 0.0
    %722 = vmatpush1.msra.mxu0 0.0
    %723 = vmatprep.subr.mxu0 0.0
    %724 = vmatpush1.msra.mxu0 0.0
    %725 = vmatprep.subr.mxu0 0.0
    %726 = vmatpush1.msra.mxu0 0.0
    %727 = vmatprep.subr.mxu0 0.0
    %728 = vmatpush1.msra.mxu0 0.0
    %729 = vmatprep.subr.mxu0 0.0
    %730 = vmatpush1.msra.mxu0 0.0
    %731 = vmatprep.subr.mxu0 0.0
    %732 = vmatpush1.msra.mxu0 0.0
    %733 = vmatprep.subr.mxu0 0.0
    %734 = vmatpush1.msra.mxu0 0.0
    %735 = vmatprep.subr.mxu0 0.0
    %736 = vmatpush1.msra.mxu0 0.0
    %737 = vmatprep.subr.mxu0 0.0
    %738 = vmatpush1.msra.mxu0 0.0
    %739 = vmatprep.subr.mxu0 0.0
    %740 = vmatpush1.msra.mxu0 0.0
    %741 = vmatprep.mubr.f32.mxu0 0.0
    %742 = vmatmul.mubr.f32.gmra.mrb[0].mxu0 %v627
    %v743 = vpop.f32.mrb[0].mxu0
    %v744 = vadd.f32 0.0, %v743
    %v745 = vpop.f32.mrb[0].mxu0
    %746 = vmatprep.mubr.f32.mxu0 0.0
    %747 = vmatmul.mubr.f32.gmra.mrb[0].mxu0 %v630
    %v748 = vpop.f32.mrb[0].mxu0
    %v749 = vadd.f32 0.0, %v748
    %v750 = vpop.f32.mrb[0].mxu0
    %751 = vmatprep.mubr.f32.mxu0 0.0
    %752 = vmatmul.mubr.f32.gmra.mrb[0].mxu0 %v633
    %v753 = vpop.f32.mrb[0].mxu0
    %v754 = vadd.f32 0.0, %v753
    %v755 = vpop.f32.mrb[0].mxu0
    %756 = vmatprep.mubr.f32.mxu0 0.0
    %757 = vmatmul.mubr.f32.gmra.mrb[0].mxu0 %v636
    %v758 = vpop.f32.mrb[0].mxu0
    %v759 = vadd.f32 0.0, %v758
    %v760 = vpop.f32.mrb[0].mxu0
    %761 = vmatprep.mubr.f32.mxu0 0.0
    %762 = vmatmul.mubr.f32.gmra.mrb[0].mxu0 %v639
    %v763 = vpop.f32.mrb[0].mxu0
    %v764 = vadd.f32 0.0, %v763
    %v765 = vpop.f32.mrb[0].mxu0
    %766 = vmatprep.mubr.f32.mxu0 0.0
    %767 = vmatmul.mubr.f32.gmra.mrb[0].mxu0 %v642
    %v768 = vpop.f32.mrb[0].mxu0
    %v769 = vadd.f32 0.0, %v768
    %v770 = vpop.f32.mrb[0].mxu0
    %771 = vmatprep.mubr.f32.mxu0 0.0
    %772 = vmatmul.mubr.f32.gmra.mrb[0].mxu0 %v645
    %v773 = vpop.f32.mrb[0].mxu0
    %v774 = vadd.f32 0.0, %v773
    %v775 = vpop.f32.mrb[0].mxu0
    %776 = vmatprep.mubr.f32.mxu0 0.0
    %777 = vmatmul.mubr.f32.gmra.mrb[0].mxu0 %v648
    %v778 = vpop.f32.mrb[0].mxu0
    %v779 = vadd.f32 0.0, %v778
    %v780 = vpop.f32.mrb[0].mxu0
    %781 = vmatprep.mubr.f32.mxu0 0.0
    %782 = vmatmul.mubr.f32.gmra.mrb[0].mxu0 %v651
    %v783 = vpop.f32.mrb[0].mxu0
    %v784 = vadd.f32 0.0, %v783
    %v785 = vpop.f32.mrb[0].mxu0
    %786 = vmatprep.mubr.f32.mxu0 0.0
    %787 = vmatmul.mubr.f32.gmra.mrb[0].mxu0 %v654
    %v788 = vpop.f32.mrb[0].mxu0
    %v789 = vadd.f32 0.0, %v788
    %v790 = vpop.f32.mrb[0].mxu0
    %791 = vmatprep.mubr.f32.mxu0 0.0
    %792 = vmatmul.mubr.f32.gmra.mrb[0].mxu0 %v657
    %v793 = vpop.f32.mrb[0].mxu0
    %v794 = vadd.f32 0.0, %v793
    %v795 = vpop.f32.mrb[0].mxu0
    %796 = vmatprep.mubr.f32.mxu0 0.0
    %797 = vmatmul.mubr.f32.gmra.mrb[0].mxu0 %v660
    %v798 = vpop.f32.mrb[0].mxu0
    %v799 = vadd.f32 0.0, %v798
    %v800 = vpop.f32.mrb[0].mxu0
    %801 = vmatprep.mubr.f32.mxu0 0.0
    %802 = vmatmul.mubr.f32.gmra.mrb[0].mxu0 %v663
    %v803 = vpop.f32.mrb[0].mxu0
    %v804 = vadd.f32 0.0, %v803
    %v805 = vpop.f32.mrb[0].mxu0
    %806 = vmatprep.mubr.f32.mxu0 0.0
    %807 = vmatmul.mubr.f32.gmra.mrb[0].mxu0 %v666
    %v808 = vpop.f32.mrb[0].mxu0
    %v809 = vadd.f32 0.0, %v808
    %v810 = vpop.f32.mrb[0].mxu0
    %811 = vmatprep.mubr.f32.mxu0 0.0
    %812 = vmatmul.mubr.f32.gmra.mrb[0].mxu0 %v669
    %v813 = vpop.f32.mrb[0].mxu0
    %v814 = vadd.f32 0.0, %v813
    %v815 = vpop.f32.mrb[0].mxu0
    %816 = vmatprep.mubr.f32.mxu0 0.0
    %817 = vmatmul.mubr.f32.gmra.mrb[0].mxu0 %v672
    %v818 = vpop.f32.mrb[0].mxu0
    %v819 = vadd.f32 0.0, %v818
    %v820 = vpop.f32.mrb[0].mxu0
    %821 = vdwg.mxu0
    %v822 = vmul.u32 %v50, 7
    %v823 = vadd.s32 %v822, %v74
    %v824 = vlaneseq
    %v825 = vshrl.u32 %v824, 7
    %v826 = vsub.s32 0, %v825
    %v827 = vrot.slane %v823, %v826
    %vm828 = vcmp.eq.s32.totalorder %v83, %v827
    %vm829 = vcmp.eq.s32.totalorder %v84, %v827
    %vm830 = vcmp.eq.s32.totalorder %v85, %v827
    %vm831 = vcmp.eq.s32.totalorder %v86, %v827
    %vm832 = vcmp.eq.s32.totalorder %v87, %v827
    %vm833 = vcmp.eq.s32.totalorder %v88, %v827
    %vm834 = vcmp.eq.s32.totalorder %v89, %v827
    %v835 = vsel %vm828, 1, 0
    %v836 = vsel %vm829, 1, 0
    %v837 = vsel %vm830, 1, 0
    %v838 = vsel %vm831, 1, 0
    %v839 = vsel %vm832, 1, 0
    %v840 = vsel %vm833, 1, 0
    %v841 = vsel %vm834, 1, 0
    %v842 = vcvt.s32.f32 %v835
    %v843 = vcvt.s32.f32 %v836
    %v844 = vcvt.s32.f32 %v837
    %v845 = vcvt.s32.f32 %v838
    %v846 = vcvt.s32.f32 %v839
    %v847 = vcvt.s32.f32 %v840
    %v848 = vcvt.s32.f32 %v841
    %v849 = vld [vmem:[%s3] sm:$0xff]
    %v850 = vld [vmem:[%s3 + $0x8] sm:$0xff]
    %v851 = vld [vmem:[%s3 + $0x10] sm:$0xff]
    %v852 = vld [vmem:[%s3 + $0x18] sm:$0xff]
    %v853 = vld [vmem:[%s3 + $0x20] sm:$0xff]
    %v854 = vld [vmem:[%s3 + $0x28] sm:$0xff]
    %v855 = vld [vmem:[%s3 + $0x30] sm:$0xff]
    %v856 = vld [vmem:[%s3 + $0x38] sm:$0xff]
    %v857 = vld [vmem:[%s3 + $0x40] sm:$0xff]
    %v858 = vld [vmem:[%s3 + $0x48] sm:$0xff]
    %v859 = vld [vmem:[%s3 + $0x50] sm:$0xff]
    %v860 = vld [vmem:[%s3 + $0x58] sm:$0xff]
    %v861 = vld [vmem:[%s3 + $0x60] sm:$0xff]
    %v862 = vld [vmem:[%s3 + $0x68] sm:$0xff]
    %v863 = vld [vmem:[%s3 + $0x70] sm:$0xff]
    %v864 = vld [vmem:[%s3 + $0x78] sm:$0xff]
    %v866 = vsel %vm131, %v849, 0
    %v869 = vsel %vm131, %v850, 0
    %v872 = vsel %vm131, %v851, 0
    %v875 = vsel %vm131, %v852, 0
    %v878 = vsel %vm131, %v853, 0
    %v881 = vsel %vm131, %v854, 0
    %v884 = vsel %vm131, %v855, 0
    %v887 = vsel %vm131, %v856, 0
    %v890 = vsel %vm131, %v857, 0
    %v893 = vsel %vm131, %v858, 0
    %v896 = vsel %vm131, %v859, 0
    %v899 = vsel %vm131, %v860, 0
    %v902 = vsel %vm131, %v861, 0
    %v905 = vsel %vm131, %v862, 0
    %v908 = vsel %vm131, %v863, 0
    %v911 = vsel %vm131, %v864, 0
    %v914 = vsel %vm180, %v848, 0
    %916 = vmatprep.subr.mxu0 0.0
    %917 = vmatpush1.msra.mxu0 %v842
    %918 = vmatprep.subr.mxu0 0.0
    %919 = vmatpush1.msra.mxu0 %v843
    %920 = vmatprep.subr.mxu0 0.0
    %921 = vmatpush1.msra.mxu0 %v844
    %922 = vmatprep.subr.mxu0 0.0
    %923 = vmatpush1.msra.mxu0 %v845
    %924 = vmatprep.subr.mxu0 0.0
    %925 = vmatpush1.msra.mxu0 %v846
    %926 = vmatprep.subr.mxu0 0.0
    %927 = vmatpush1.msra.mxu0 %v847
    %928 = vmatprep.subr.mxu0 0.0
    %929 = vmatpush1.msra.mxu0 %v914
    %930 = vmatprep.subr.mxu0 0.0
    %931 = vmatpush1.msra.mxu0 0.0
    %932 = vmatprep.subr.mxu0 0.0
    %933 = vmatpush1.msra.mxu0 0.0
    %934 = vmatprep.subr.mxu0 0.0
    %935 = vmatpush1.msra.mxu0 0.0
    %936 = vmatprep.subr.mxu0 0.0
    %937 = vmatpush1.msra.mxu0 0.0
    %938 = vmatprep.subr.mxu0 0.0
    %939 = vmatpush1.msra.mxu0 0.0
    %940 = vmatprep.subr.mxu0 0.0
    %941 = vmatpush1.msra.mxu0 0.0
    %942 = vmatprep.subr.mxu0 0.0
    %943 = vmatpush1.msra.mxu0 0.0
    %944 = vmatprep.subr.mxu0 0.0
    %945 = vmatpush1.msra.mxu0 0.0
    %946 = vmatprep.subr.mxu0 0.0
    %947 = vmatpush1.msra.mxu0 0.0
    %948 = vmatprep.subr.mxu0 0.0
    %949 = vmatpush1.msra.mxu0 0.0
    %950 = vmatprep.subr.mxu0 0.0
    %951 = vmatpush1.msra.mxu0 0.0
    %952 = vmatprep.subr.mxu0 0.0
    %953 = vmatpush1.msra.mxu0 0.0
    %954 = vmatprep.subr.mxu0 0.0
    %955 = vmatpush1.msra.mxu0 0.0
    %956 = vmatprep.subr.mxu0 0.0
    %957 = vmatpush1.msra.mxu0 0.0
    %958 = vmatprep.subr.mxu0 0.0
    %959 = vmatpush1.msra.mxu0 0.0
    %960 = vmatprep.subr.mxu0 0.0
    %961 = vmatpush1.msra.mxu0 0.0
    %962 = vmatprep.subr.mxu0 0.0
    %963 = vmatpush1.msra.mxu0 0.0
    %964 = vmatprep.subr.mxu0 0.0
    %965 = vmatpush1.msra.mxu0 0.0
    %966 = vmatprep.subr.mxu0 0.0
    %967 = vmatpush1.msra.mxu0 0.0
    %968 = vmatprep.subr.mxu0 0.0
    %969 = vmatpush1.msra.mxu0 0.0
    %970 = vmatprep.subr.mxu0 0.0
    %971 = vmatpush1.msra.mxu0 0.0
    %972 = vmatprep.subr.mxu0 0.0
    %973 = vmatpush1.msra.mxu0 0.0
    %974 = vmatprep.subr.mxu0 0.0
    %975 = vmatpush1.msra.mxu0 0.0
    %976 = vmatprep.subr.mxu0 0.0
    %977 = vmatpush1.msra.mxu0 0.0
    %978 = vmatprep.subr.mxu0 0.0
    %979 = vmatpush1.msra.mxu0 0.0
    %980 = vmatprep.mubr.f32.mxu0 0.0
    %981 = vmatmul.mubr.f32.gmra.mrb[0].mxu0 %v866
    %v982 = vpop.f32.mrb[0].mxu0
    %v983 = vadd.f32 0.0, %v982
    %v984 = vpop.f32.mrb[0].mxu0
    %985 = vmatprep.mubr.f32.mxu0 0.0
    %986 = vmatmul.mubr.f32.gmra.mrb[0].mxu0 %v869
    %v987 = vpop.f32.mrb[0].mxu0
    %v988 = vadd.f32 0.0, %v987
    %v989 = vpop.f32.mrb[0].mxu0
    %990 = vmatprep.mubr.f32.mxu0 0.0
    %991 = vmatmul.mubr.f32.gmra.mrb[0].mxu0 %v872
    %v992 = vpop.f32.mrb[0].mxu0
    %v993 = vadd.f32 0.0, %v992
    %v994 = vpop.f32.mrb[0].mxu0
    %995 = vmatprep.mubr.f32.mxu0 0.0
    %996 = vmatmul.mubr.f32.gmra.mrb[0].mxu0 %v875
    %v997 = vpop.f32.mrb[0].mxu0
    %v998 = vadd.f32 0.0, %v997
    %v999 = vpop.f32.mrb[0].mxu0
    %1000 = vmatprep.mubr.f32.mxu0 0.0
    %1001 = vmatmul.mubr.f32.gmra.mrb[0].mxu0 %v878
    %v1002 = vpop.f32.mrb[0].mxu0
    %v1003 = vadd.f32 0.0, %v1002
    %v1004 = vpop.f32.mrb[0].mxu0
    %1005 = vmatprep.mubr.f32.mxu0 0.0
    %1006 = vmatmul.mubr.f32.gmra.mrb[0].mxu0 %v881
    %v1007 = vpop.f32.mrb[0].mxu0
    %v1008 = vadd.f32 0.0, %v1007
    %v1009 = vpop.f32.mrb[0].mxu0
    %1010 = vmatprep.mubr.f32.mxu0 0.0
    %1011 = vmatmul.mubr.f32.gmra.mrb[0].mxu0 %v884
    %v1012 = vpop.f32.mrb[0].mxu0
    %v1013 = vadd.f32 0.0, %v1012
    %v1014 = vpop.f32.mrb[0].mxu0
    %1015 = vmatprep.mubr.f32.mxu0 0.0
    %1016 = vmatmul.mubr.f32.gmra.mrb[0].mxu0 %v887
    %v1017 = vpop.f32.mrb[0].mxu0
    %v1018 = vadd.f32 0.0, %v1017
    %v1019 = vpop.f32.mrb[0].mxu0
    %1020 = vmatprep.mubr.f32.mxu0 0.0
    %1021 = vmatmul.mubr.f32.gmra.mrb[0].mxu0 %v890
    %v1022 = vpop.f32.mrb[0].mxu0
    %v1023 = vadd.f32 0.0, %v1022
    %v1024 = vpop.f32.mrb[0].mxu0
    %1025 = vmatprep.mubr.f32.mxu0 0.0
    %1026 = vmatmul.mubr.f32.gmra.mrb[0].mxu0 %v893
    %v1027 = vpop.f32.mrb[0].mxu0
    %v1028 = vadd.f32 0.0, %v1027
    %v1029 = vpop.f32.mrb[0].mxu0
    %1030 = vmatprep.mubr.f32.mxu0 0.0
    %1031 = vmatmul.mubr.f32.gmra.mrb[0].mxu0 %v896
    %v1032 = vpop.f32.mrb[0].mxu0
    %v1033 = vadd.f32 0.0, %v1032
    %v1034 = vpop.f32.mrb[0].mxu0
    %1035 = vmatprep.mubr.f32.mxu0 0.0
    %1036 = vmatmul.mubr.f32.gmra.mrb[0].mxu0 %v899
    %v1037 = vpop.f32.mrb[0].mxu0
    %v1038 = vadd.f32 0.0, %v1037
    %v1039 = vpop.f32.mrb[0].mxu0
    %1040 = vmatprep.mubr.f32.mxu0 0.0
    %1041 = vmatmul.mubr.f32.gmra.mrb[0].mxu0 %v902
    %v1042 = vpop.f32.mrb[0].mxu0
    %v1043 = vadd.f32 0.0, %v1042
    %v1044 = vpop.f32.mrb[0].mxu0
    %1045 = vmatprep.mubr.f32.mxu0 0.0
    %1046 = vmatmul.mubr.f32.gmra.mrb[0].mxu0 %v905
    %v1047 = vpop.f32.mrb[0].mxu0
    %v1048 = vadd.f32 0.0, %v1047
    %v1049 = vpop.f32.mrb[0].mxu0
    %1050 = vmatprep.mubr.f32.mxu0 0.0
    %1051 = vmatmul.mubr.f32.gmra.mrb[0].mxu0 %v908
    %v1052 = vpop.f32.mrb[0].mxu0
    %v1053 = vadd.f32 0.0, %v1052
    %v1054 = vpop.f32.mrb[0].mxu0
    %1055 = vmatprep.mubr.f32.mxu0 0.0
    %1056 = vmatmul.mubr.f32.gmra.mrb[0].mxu0 %v911
    %v1057 = vpop.f32.mrb[0].mxu0
    %v1058 = vadd.f32 0.0, %v1057
    %v1059 = vpop.f32.mrb[0].mxu0
    %1060 = vdwg.mxu0
    %v1061 = vmul.f32 %v744, %v983
    %v1062 = vmul.f32 %v749, %v988
    %v1063 = vmul.f32 %v754, %v993
    %v1064 = vmul.f32 %v759, %v998
    %v1065 = vmul.f32 %v764, %v1003
    %v1066 = vmul.f32 %v769, %v1008
    %v1067 = vmul.f32 %v774, %v1013
    %v1068 = vmul.f32 %v779, %v1018
    %v1069 = vmul.f32 %v784, %v1023
    %v1070 = vmul.f32 %v789, %v1028
    %v1071 = vmul.f32 %v794, %v1033
    %v1072 = vmul.f32 %v799, %v1038
    %v1073 = vmul.f32 %v804, %v1043
    %v1074 = vmul.f32 %v809, %v1048
    %v1075 = vmul.f32 %v814, %v1053
    %v1076 = vmul.f32 %v819, %v1058
    %v1077 = vadd.f32 %v568, %v1061
    %v1078 = vadd.f32 %v569, %v1062
    %v1079 = vadd.f32 %v570, %v1063
    %v1080 = vadd.f32 %v571, %v1064
    %v1081 = vadd.f32 %v572, %v1065
    %v1082 = vadd.f32 %v573, %v1066
    %v1083 = vadd.f32 %v574, %v1067
    %v1084 = vadd.f32 %v575, %v1068
    %v1085 = vadd.f32 %v576, %v1069
    %v1086 = vadd.f32 %v577, %v1070
    %v1087 = vadd.f32 %v578, %v1071
    %v1088 = vadd.f32 %v579, %v1072
    %v1089 = vadd.f32 %v580, %v1073
    %v1090 = vadd.f32 %v581, %v1074
    %v1091 = vadd.f32 %v582, %v1075
    %v1092 = vadd.f32 %v583, %v1076
    %v1093 = vadd.s32 %v80, %v74
    %v1094 = vlaneseq
    %v1095 = vshrl.u32 %v1094, 7
    %v1096 = vsub.s32 0, %v1095
    %v1097 = vrot.slane %v1093, %v1096
    %vm1098 = vcmp.eq.s32.totalorder %v83, %v1097
    %vm1099 = vcmp.eq.s32.totalorder %v84, %v1097
    %vm1100 = vcmp.eq.s32.totalorder %v85, %v1097
    %vm1101 = vcmp.eq.s32.totalorder %v86, %v1097
    %vm1102 = vcmp.eq.s32.totalorder %v87, %v1097
    %vm1103 = vcmp.eq.s32.totalorder %v88, %v1097
    %vm1104 = vcmp.eq.s32.totalorder %v89, %v1097
    %v1105 = vsel %vm1098, 1, 0
    %v1106 = vsel %vm1099, 1, 0
    %v1107 = vsel %vm1100, 1, 0
    %v1108 = vsel %vm1101, 1, 0
    %v1109 = vsel %vm1102, 1, 0
    %v1110 = vsel %vm1103, 1, 0
    %v1111 = vsel %vm1104, 1, 0
    %v1112 = vcvt.s32.f32 %v1105
    %v1113 = vcvt.s32.f32 %v1106
    %v1114 = vcvt.s32.f32 %v1107
    %v1115 = vcvt.s32.f32 %v1108
    %v1116 = vcvt.s32.f32 %v1109
    %v1117 = vcvt.s32.f32 %v1110
    %v1118 = vcvt.s32.f32 %v1111
    %v1119 = vld [vmem:[%s4] sm:$0xff]
    %v1120 = vld [vmem:[%s4 + $0x8] sm:$0xff]
    %v1121 = vld [vmem:[%s4 + $0x10] sm:$0xff]
    %v1122 = vld [vmem:[%s4 + $0x18] sm:$0xff]
    %v1123 = vld [vmem:[%s4 + $0x20] sm:$0xff]
    %v1124 = vld [vmem:[%s4 + $0x28] sm:$0xff]
    %v1125 = vld [vmem:[%s4 + $0x30] sm:$0xff]
    %v1126 = vld [vmem:[%s4 + $0x38] sm:$0xff]
    %v1127 = vld [vmem:[%s4 + $0x40] sm:$0xff]
    %v1128 = vld [vmem:[%s4 + $0x48] sm:$0xff]
    %v1129 = vld [vmem:[%s4 + $0x50] sm:$0xff]
    %v1130 = vld [vmem:[%s4 + $0x58] sm:$0xff]
    %v1131 = vld [vmem:[%s4 + $0x60] sm:$0xff]
    %v1132 = vld [vmem:[%s4 + $0x68] sm:$0xff]
    %v1133 = vld [vmem:[%s4 + $0x70] sm:$0xff]
    %v1134 = vld [vmem:[%s4 + $0x78] sm:$0xff]
    %v1136 = vsel %vm131, %v1119, 0
    %v1139 = vsel %vm131, %v1120, 0
    %v1142 = vsel %vm131, %v1121, 0
    %v1145 = vsel %vm131, %v1122, 0
    %v1148 = vsel %vm131, %v1123, 0
    %v1151 = vsel %vm131, %v1124, 0
    %v1154 = vsel %vm131, %v1125, 0
    %v1157 = vsel %vm131, %v1126, 0
    %v1160 = vsel %vm131, %v1127, 0
    %v1163 = vsel %vm131, %v1128, 0
    %v1166 = vsel %vm131, %v1129, 0
    %v1169 = vsel %vm131, %v1130, 0
    %v1172 = vsel %vm131, %v1131, 0
    %v1175 = vsel %vm131, %v1132, 0
    %v1178 = vsel %vm131, %v1133, 0
    %v1181 = vsel %vm131, %v1134, 0
    %v1184 = vsel %vm180, %v1118, 0
    %1186 = vmatprep.subr.mxu0 0.0
    %1187 = vmatpush1.msra.mxu0 %v1112
    %1188 = vmatprep.subr.mxu0 0.0
    %1189 = vmatpush1.msra.mxu0 %v1113
    %1190 = vmatprep.subr.mxu0 0.0
    %1191 = vmatpush1.msra.mxu0 %v1114
    %1192 = vmatprep.subr.mxu0 0.0
    %1193 = vmatpush1.msra.mxu0 %v1115
    %1194 = vmatprep.subr.mxu0 0.0
    %1195 = vmatpush1.msra.mxu0 %v1116
    %1196 = vmatprep.subr.mxu0 0.0
    %1197 = vmatpush1.msra.mxu0 %v1117
    %1198 = vmatprep.subr.mxu0 0.0
    %1199 = vmatpush1.msra.mxu0 %v1184
    %1200 = vmatprep.subr.mxu0 0.0
    %1201 = vmatpush1.msra.mxu0 0.0
    %1202 = vmatprep.subr.mxu0 0.0
    %1203 = vmatpush1.msra.mxu0 0.0
    %1204 = vmatprep.subr.mxu0 0.0
    %1205 = vmatpush1.msra.mxu0 0.0
    %1206 = vmatprep.subr.mxu0 0.0
    %1207 = vmatpush1.msra.mxu0 0.0
    %1208 = vmatprep.subr.mxu0 0.0
    %1209 = vmatpush1.msra.mxu0 0.0
    %1210 = vmatprep.subr.mxu0 0.0
    %1211 = vmatpush1.msra.mxu0 0.0
    %1212 = vmatprep.subr.mxu0 0.0
    %1213 = vmatpush1.msra.mxu0 0.0
    %1214 = vmatprep.subr.mxu0 0.0
    %1215 = vmatpush1.msra.mxu0 0.0
    %1216 = vmatprep.subr.mxu0 0.0
    %1217 = vmatpush1.msra.mxu0 0.0
    %1218 = vmatprep.subr.mxu0 0.0
    %1219 = vmatpush1.msra.mxu0 0.0
    %1220 = vmatprep.subr.mxu0 0.0
    %1221 = vmatpush1.msra.mxu0 0.0
    %1222 = vmatprep.subr.mxu0 0.0
    %1223 = vmatpush1.msra.mxu0 0.0
    %1224 = vmatprep.subr.mxu0 0.0
    %1225 = vmatpush1.msra.mxu0 0.0
    %1226 = vmatprep.subr.mxu0 0.0
    %1227 = vmatpush1.msra.mxu0 0.0
    %1228 = vmatprep.subr.mxu0 0.0
    %1229 = vmatpush1.msra.mxu0 0.0
    %1230 = vmatprep.subr.mxu0 0.0
    %1231 = vmatpush1.msra.mxu0 0.0
    %1232 = vmatprep.subr.mxu0 0.0
    %1233 = vmatpush1.msra.mxu0 0.0
    %1234 = vmatprep.subr.mxu0 0.0
    %1235 = vmatpush1.msra.mxu0 0.0
    %1236 = vmatprep.subr.mxu0 0.0
    %1237 = vmatpush1.msra.mxu0 0.0
    %1238 = vmatprep.subr.mxu0 0.0
    %1239 = vmatpush1.msra.mxu0 0.0
    %1240 = vmatprep.subr.mxu0 0.0
    %1241 = vmatpush1.msra.mxu0 0.0
    %1242 = vmatprep.subr.mxu0 0.0
    %1243 = vmatpush1.msra.mxu0 0.0
    %1244 = vmatprep.subr.mxu0 0.0
    %1245 = vmatpush1.msra.mxu0 0.0
    %1246 = vmatprep.subr.mxu0 0.0
    %1247 = vmatpush1.msra.mxu0 0.0
    %1248 = vmatprep.subr.mxu0 0.0
    %1249 = vmatpush1.msra.mxu0 0.0
    %1250 = vmatprep.mubr.f32.mxu0 0.0
    %1251 = vmatmul.mubr.f32.gmra.mrb[0].mxu0 %v1136
    %v1252 = vpop.f32.mrb[0].mxu0
    %v1253 = vadd.f32 0.0, %v1252
    %v1254 = vpop.f32.mrb[0].mxu0
    %1255 = vmatprep.mubr.f32.mxu0 0.0
    %1256 = vmatmul.mubr.f32.gmra.mrb[0].mxu0 %v1139
    %v1257 = vpop.f32.mrb[0].mxu0
    %v1258 = vadd.f32 0.0, %v1257
    %v1259 = vpop.f32.mrb[0].mxu0
    %1260 = vmatprep.mubr.f32.mxu0 0.0
    %1261 = vmatmul.mubr.f32.gmra.mrb[0].mxu0 %v1142
    %v1262 = vpop.f32.mrb[0].mxu0
    %v1263 = vadd.f32 0.0, %v1262
    %v1264 = vpop.f32.mrb[0].mxu0
    %1265 = vmatprep.mubr.f32.mxu0 0.0
    %1266 = vmatmul.mubr.f32.gmra.mrb[0].mxu0 %v1145
    %v1267 = vpop.f32.mrb[0].mxu0
    %v1268 = vadd.f32 0.0, %v1267
    %v1269 = vpop.f32.mrb[0].mxu0
    %1270 = vmatprep.mubr.f32.mxu0 0.0
    %1271 = vmatmul.mubr.f32.gmra.mrb[0].mxu0 %v1148
    %v1272 = vpop.f32.mrb[0].mxu0
    %v1273 = vadd.f32 0.0, %v1272
    %v1274 = vpop.f32.mrb[0].mxu0
    %1275 = vmatprep.mubr.f32.mxu0 0.0
    %1276 = vmatmul.mubr.f32.gmra.mrb[0].mxu0 %v1151
    %v1277 = vpop.f32.mrb[0].mxu0
    %v1278 = vadd.f32 0.0, %v1277
    %v1279 = vpop.f32.mrb[0].mxu0
    %1280 = vmatprep.mubr.f32.mxu0 0.0
    %1281 = vmatmul.mubr.f32.gmra.mrb[0].mxu0 %v1154
    %v1282 = vpop.f32.mrb[0].mxu0
    %v1283 = vadd.f32 0.0, %v1282
    %v1284 = vpop.f32.mrb[0].mxu0
    %1285 = vmatprep.mubr.f32.mxu0 0.0
    %1286 = vmatmul.mubr.f32.gmra.mrb[0].mxu0 %v1157
    %v1287 = vpop.f32.mrb[0].mxu0
    %v1288 = vadd.f32 0.0, %v1287
    %v1289 = vpop.f32.mrb[0].mxu0
    %1290 = vmatprep.mubr.f32.mxu0 0.0
    %1291 = vmatmul.mubr.f32.gmra.mrb[0].mxu0 %v1160
    %v1292 = vpop.f32.mrb[0].mxu0
    %v1293 = vadd.f32 0.0, %v1292
    %v1294 = vpop.f32.mrb[0].mxu0
    %1295 = vmatprep.mubr.f32.mxu0 0.0
    %1296 = vmatmul.mubr.f32.gmra.mrb[0].mxu0 %v1163
    %v1297 = vpop.f32.mrb[0].mxu0
    %v1298 = vadd.f32 0.0, %v1297
    %v1299 = vpop.f32.mrb[0].mxu0
    %1300 = vmatprep.mubr.f32.mxu0 0.0
    %1301 = vmatmul.mubr.f32.gmra.mrb[0].mxu0 %v1166
    %v1302 = vpop.f32.mrb[0].mxu0
    %v1303 = vadd.f32 0.0, %v1302
    %v1304 = vpop.f32.mrb[0].mxu0
    %1305 = vmatprep.mubr.f32.mxu0 0.0
    %1306 = vmatmul.mubr.f32.gmra.mrb[0].mxu0 %v1169
    %v1307 = vpop.f32.mrb[0].mxu0
    %v1308 = vadd.f32 0.0, %v1307
    %v1309 = vpop.f32.mrb[0].mxu0
    %1310 = vmatprep.mubr.f32.mxu0 0.0
    %1311 = vmatmul.mubr.f32.gmra.mrb[0].mxu0 %v1172
    %v1312 = vpop.f32.mrb[0].mxu0
    %v1313 = vadd.f32 0.0, %v1312
    %v1314 = vpop.f32.mrb[0].mxu0
    %1315 = vmatprep.mubr.f32.mxu0 0.0
    %1316 = vmatmul.mubr.f32.gmra.mrb[0].mxu0 %v1175
    %v1317 = vpop.f32.mrb[0].mxu0
    %v1318 = vadd.f32 0.0, %v1317
    %v1319 = vpop.f32.mrb[0].mxu0
    %1320 = vmatprep.mubr.f32.mxu0 0.0
    %1321 = vmatmul.mubr.f32.gmra.mrb[0].mxu0 %v1178
    %v1322 = vpop.f32.mrb[0].mxu0
    %v1323 = vadd.f32 0.0, %v1322
    %v1324 = vpop.f32.mrb[0].mxu0
    %1325 = vmatprep.mubr.f32.mxu0 0.0
    %1326 = vmatmul.mubr.f32.gmra.mrb[0].mxu0 %v1181
    %v1327 = vpop.f32.mrb[0].mxu0
    %v1328 = vadd.f32 0.0, %v1327
    %v1329 = vpop.f32.mrb[0].mxu0
    %1330 = vdwg.mxu0
    %v1331 = vadd.s32 %v822, %v62
    %v1332 = vlaneseq
    %v1333 = vshrl.u32 %v1332, 7
    %v1334 = vsub.s32 0, %v1333
    %v1335 = vrot.slane %v1331, %v1334
    %vm1336 = vcmp.eq.s32.totalorder %v83, %v1335
    %vm1337 = vcmp.eq.s32.totalorder %v84, %v1335
    %vm1338 = vcmp.eq.s32.totalorder %v85, %v1335
    %vm1339 = vcmp.eq.s32.totalorder %v86, %v1335
    %vm1340 = vcmp.eq.s32.totalorder %v87, %v1335
    %vm1341 = vcmp.eq.s32.totalorder %v88, %v1335
    %vm1342 = vcmp.eq.s32.totalorder %v89, %v1335
    %v1343 = vsel %vm1336, 1, 0
    %v1344 = vsel %vm1337, 1, 0
    %v1345 = vsel %vm1338, 1, 0
    %v1346 = vsel %vm1339, 1, 0
    %v1347 = vsel %vm1340, 1, 0
    %v1348 = vsel %vm1341, 1, 0
    %v1349 = vsel %vm1342, 1, 0
    %v1350 = vcvt.s32.f32 %v1343
    %v1351 = vcvt.s32.f32 %v1344
    %v1352 = vcvt.s32.f32 %v1345
    %v1353 = vcvt.s32.f32 %v1346
    %v1354 = vcvt.s32.f32 %v1347
    %v1355 = vcvt.s32.f32 %v1348
    %v1356 = vcvt.s32.f32 %v1349
    %v1357 = vld [vmem:[%s5] sm:$0xff]
    %v1358 = vld [vmem:[%s5 + $0x8] sm:$0xff]
    %v1359 = vld [vmem:[%s5 + $0x10] sm:$0xff]
    %v1360 = vld [vmem:[%s5 + $0x18] sm:$0xff]
    %v1361 = vld [vmem:[%s5 + $0x20] sm:$0xff]
    %v1362 = vld [vmem:[%s5 + $0x28] sm:$0xff]
    %v1363 = vld [vmem:[%s5 + $0x30] sm:$0xff]
    %v1364 = vld [vmem:[%s5 + $0x38] sm:$0xff]
    %v1365 = vld [vmem:[%s5 + $0x40] sm:$0xff]
    %v1366 = vld [vmem:[%s5 + $0x48] sm:$0xff]
    %v1367 = vld [vmem:[%s5 + $0x50] sm:$0xff]
    %v1368 = vld [vmem:[%s5 + $0x58] sm:$0xff]
    %v1369 = vld [vmem:[%s5 + $0x60] sm:$0xff]
    %v1370 = vld [vmem:[%s5 + $0x68] sm:$0xff]
    %v1371 = vld [vmem:[%s5 + $0x70] sm:$0xff]
    %v1372 = vld [vmem:[%s5 + $0x78] sm:$0xff]
    %v1374 = vsel %vm131, %v1357, 0
    %v1377 = vsel %vm131, %v1358, 0
    %v1380 = vsel %vm131, %v1359, 0
    %v1383 = vsel %vm131, %v1360, 0
    %v1386 = vsel %vm131, %v1361, 0
    %v1389 = vsel %vm131, %v1362, 0
    %v1392 = vsel %vm131, %v1363, 0
    %v1395 = vsel %vm131, %v1364, 0
    %v1398 = vsel %vm131, %v1365, 0
    %v1401 = vsel %vm131, %v1366, 0
    %v1404 = vsel %vm131, %v1367, 0
    %v1407 = vsel %vm131, %v1368, 0
    %v1410 = vsel %vm131, %v1369, 0
    %v1413 = vsel %vm131, %v1370, 0
    %v1416 = vsel %vm131, %v1371, 0
    %v1419 = vsel %vm131, %v1372, 0
    %v1422 = vsel %vm180, %v1356, 0
    %1424 = vmatprep.subr.mxu0 0.0
    %1425 = vmatpush1.msra.mxu0 %v1350
    %1426 = vmatprep.subr.mxu0 0.0
    %1427 = vmatpush1.msra.mxu0 %v1351
    %1428 = vmatprep.subr.mxu0 0.0
    %1429 = vmatpush1.msra.mxu0 %v1352
    %1430 = vmatprep.subr.mxu0 0.0
    %1431 = vmatpush1.msra.mxu0 %v1353
    %1432 = vmatprep.subr.mxu0 0.0
    %1433 = vmatpush1.msra.mxu0 %v1354
    %1434 = vmatprep.subr.mxu0 0.0
    %1435 = vmatpush1.msra.mxu0 %v1355
    %1436 = vmatprep.subr.mxu0 0.0
    %1437 = vmatpush1.msra.mxu0 %v1422
    %1438 = vmatprep.subr.mxu0 0.0
    %1439 = vmatpush1.msra.mxu0 0.0
    %1440 = vmatprep.subr.mxu0 0.0
    %1441 = vmatpush1.msra.mxu0 0.0
    %1442 = vmatprep.subr.mxu0 0.0
    %1443 = vmatpush1.msra.mxu0 0.0
    %1444 = vmatprep.subr.mxu0 0.0
    %1445 = vmatpush1.msra.mxu0 0.0
    %1446 = vmatprep.subr.mxu0 0.0
    %1447 = vmatpush1.msra.mxu0 0.0
    %1448 = vmatprep.subr.mxu0 0.0
    %1449 = vmatpush1.msra.mxu0 0.0
    %1450 = vmatprep.subr.mxu0 0.0
    %1451 = vmatpush1.msra.mxu0 0.0
    %1452 = vmatprep.subr.mxu0 0.0
    %1453 = vmatpush1.msra.mxu0 0.0
    %1454 = vmatprep.subr.mxu0 0.0
    %1455 = vmatpush1.msra.mxu0 0.0
    %1456 = vmatprep.subr.mxu0 0.0
    %1457 = vmatpush1.msra.mxu0 0.0
    %1458 = vmatprep.subr.mxu0 0.0
    %1459 = vmatpush1.msra.mxu0 0.0
    %1460 = vmatprep.subr.mxu0 0.0
    %1461 = vmatpush1.msra.mxu0 0.0
    %1462 = vmatprep.subr.mxu0 0.0
    %1463 = vmatpush1.msra.mxu0 0.0
    %1464 = vmatprep.subr.mxu0 0.0
    %1465 = vmatpush1.msra.mxu0 0.0
    %1466 = vmatprep.subr.mxu0 0.0
    %1467 = vmatpush1.msra.mxu0 0.0
    %1468 = vmatprep.subr.mxu0 0.0
    %1469 = vmatpush1.msra.mxu0 0.0
    %1470 = vmatprep.subr.mxu0 0.0
    %1471 = vmatpush1.msra.mxu0 0.0
    %1472 = vmatprep.subr.mxu0 0.0
    %1473 = vmatpush1.msra.mxu0 0.0
    %1474 = vmatprep.subr.mxu0 0.0
    %1475 = vmatpush1.msra.mxu0 0.0
    %1476 = vmatprep.subr.mxu0 0.0
    %1477 = vmatpush1.msra.mxu0 0.0
    %1478 = vmatprep.subr.mxu0 0.0
    %1479 = vmatpush1.msra.mxu0 0.0
    %1480 = vmatprep.subr.mxu0 0.0
    %1481 = vmatpush1.msra.mxu0 0.0
    %1482 = vmatprep.subr.mxu0 0.0
    %1483 = vmatpush1.msra.mxu0 0.0
    %1484 = vmatprep.subr.mxu0 0.0
    %1485 = vmatpush1.msra.mxu0 0.0
    %1486 = vmatprep.subr.mxu0 0.0
    %1487 = vmatpush1.msra.mxu0 0.0
    %1488 = vmatprep.mubr.f32.mxu0 0.0
    %1489 = vmatmul.mubr.f32.gmra.mrb[0].mxu0 %v1374
    %v1490 = vpop.f32.mrb[0].mxu0
    %v1491 = vadd.f32 0.0, %v1490
    %v1492 = vpop.f32.mrb[0].mxu0
    %1493 = vmatprep.mubr.f32.mxu0 0.0
    %1494 = vmatmul.mubr.f32.gmra.mrb[0].mxu0 %v1377
    %v1495 = vpop.f32.mrb[0].mxu0
    %v1496 = vadd.f32 0.0, %v1495
    %v1497 = vpop.f32.mrb[0].mxu0
    %1498 = vmatprep.mubr.f32.mxu0 0.0
    %1499 = vmatmul.mubr.f32.gmra.mrb[0].mxu0 %v1380
    %v1500 = vpop.f32.mrb[0].mxu0
    %v1501 = vadd.f32 0.0, %v1500
    %v1502 = vpop.f32.mrb[0].mxu0
    %1503 = vmatprep.mubr.f32.mxu0 0.0
    %1504 = vmatmul.mubr.f32.gmra.mrb[0].mxu0 %v1383
    %v1505 = vpop.f32.mrb[0].mxu0
    %v1506 = vadd.f32 0.0, %v1505
    %v1507 = vpop.f32.mrb[0].mxu0
    %1508 = vmatprep.mubr.f32.mxu0 0.0
    %1509 = vmatmul.mubr.f32.gmra.mrb[0].mxu0 %v1386
    %v1510 = vpop.f32.mrb[0].mxu0
    %v1511 = vadd.f32 0.0, %v1510
    %v1512 = vpop.f32.mrb[0].mxu0
    %1513 = vmatprep.mubr.f32.mxu0 0.0
    %1514 = vmatmul.mubr.f32.gmra.mrb[0].mxu0 %v1389
    %v1515 = vpop.f32.mrb[0].mxu0
    %v1516 = vadd.f32 0.0, %v1515
    %v1517 = vpop.f32.mrb[0].mxu0
    %1518 = vmatprep.mubr.f32.mxu0 0.0
    %1519 = vmatmul.mubr.f32.gmra.mrb[0].mxu0 %v1392
    %v1520 = vpop.f32.mrb[0].mxu0
    %v1521 = vadd.f32 0.0, %v1520
    %v1522 = vpop.f32.mrb[0].mxu0
    %1523 = vmatprep.mubr.f32.mxu0 0.0
    %1524 = vmatmul.mubr.f32.gmra.mrb[0].mxu0 %v1395
    %v1525 = vpop.f32.mrb[0].mxu0
    %v1526 = vadd.f32 0.0, %v1525
    %v1527 = vpop.f32.mrb[0].mxu0
    %1528 = vmatprep.mubr.f32.mxu0 0.0
    %1529 = vmatmul.mubr.f32.gmra.mrb[0].mxu0 %v1398
    %v1530 = vpop.f32.mrb[0].mxu0
    %v1531 = vadd.f32 0.0, %v1530
    %v1532 = vpop.f32.mrb[0].mxu0
    %1533 = vmatprep.mubr.f32.mxu0 0.0
    %1534 = vmatmul.mubr.f32.gmra.mrb[0].mxu0 %v1401
    %v1535 = vpop.f32.mrb[0].mxu0
    %v1536 = vadd.f32 0.0, %v1535
    %v1537 = vpop.f32.mrb[0].mxu0
    %1538 = vmatprep.mubr.f32.mxu0 0.0
    %1539 = vmatmul.mubr.f32.gmra.mrb[0].mxu0 %v1404
    %v1540 = vpop.f32.mrb[0].mxu0
    %v1541 = vadd.f32 0.0, %v1540
    %v1542 = vpop.f32.mrb[0].mxu0
    %1543 = vmatprep.mubr.f32.mxu0 0.0
    %1544 = vmatmul.mubr.f32.gmra.mrb[0].mxu0 %v1407
    %v1545 = vpop.f32.mrb[0].mxu0
    %v1546 = vadd.f32 0.0, %v1545
    %v1547 = vpop.f32.mrb[0].mxu0
    %1548 = vmatprep.mubr.f32.mxu0 0.0
    %1549 = vmatmul.mubr.f32.gmra.mrb[0].mxu0 %v1410
    %v1550 = vpop.f32.mrb[0].mxu0
    %v1551 = vadd.f32 0.0, %v1550
    %v1552 = vpop.f32.mrb[0].mxu0
    %1553 = vmatprep.mubr.f32.mxu0 0.0
    %1554 = vmatmul.mubr.f32.gmra.mrb[0].mxu0 %v1413
    %v1555 = vpop.f32.mrb[0].mxu0
    %v1556 = vadd.f32 0.0, %v1555
    %v1557 = vpop.f32.mrb[0].mxu0
    %1558 = vmatprep.mubr.f32.mxu0 0.0
    %1559 = vmatmul.mubr.f32.gmra.mrb[0].mxu0 %v1416
    %v1560 = vpop.f32.mrb[0].mxu0
    %v1561 = vadd.f32 0.0, %v1560
    %v1562 = vpop.f32.mrb[0].mxu0
    %1563 = vmatprep.mubr.f32.mxu0 0.0
    %1564 = vmatmul.mubr.f32.gmra.mrb[0].mxu0 %v1419
    %v1565 = vpop.f32.mrb[0].mxu0
    %v1566 = vadd.f32 0.0, %v1565
    %v1567 = vpop.f32.mrb[0].mxu0
    %1568 = vdwg.mxu0
    %v1569 = vmul.f32 %v1253, %v1491
    %v1570 = vmul.f32 %v1258, %v1496
    %v1571 = vmul.f32 %v1263, %v1501
    %v1572 = vmul.f32 %v1268, %v1506
    %v1573 = vmul.f32 %v1273, %v1511
    %v1574 = vmul.f32 %v1278, %v1516
    %v1575 = vmul.f32 %v1283, %v1521
    %v1576 = vmul.f32 %v1288, %v1526
    %v1577 = vmul.f32 %v1293, %v1531
    %v1578 = vmul.f32 %v1298, %v1536
    %v1579 = vmul.f32 %v1303, %v1541
    %v1580 = vmul.f32 %v1308, %v1546
    %v1581 = vmul.f32 %v1313, %v1551
    %v1582 = vmul.f32 %v1318, %v1556
    %v1583 = vmul.f32 %v1323, %v1561
    %v1584 = vmul.f32 %v1328, %v1566
    %v1585 = vadd.f32 %v1077, %v1569
    %v1586 = vadd.f32 %v1078, %v1570
    %v1587 = vadd.f32 %v1079, %v1571
    %v1588 = vadd.f32 %v1080, %v1572
    %v1589 = vadd.f32 %v1081, %v1573
    %v1590 = vadd.f32 %v1082, %v1574
    %v1591 = vadd.f32 %v1083, %v1575
    %v1592 = vadd.f32 %v1084, %v1576
    %v1593 = vadd.f32 %v1085, %v1577
    %v1594 = vadd.f32 %v1086, %v1578
    %v1595 = vadd.f32 %v1087, %v1579
    %v1596 = vadd.f32 %v1088, %v1580
    %v1597 = vadd.f32 %v1089, %v1581
    %v1598 = vadd.f32 %v1090, %v1582
    %v1599 = vadd.f32 %v1091, %v1583
    %v1600 = vadd.f32 %v1092, %v1584
    %v1601 = vshra.s32 %v83, 3
    %v1602 = vshra.s32 %v84, 3
    %v1603 = vand.u32 %v1601, 1
    %v1604 = vand.u32 %v1602, 1
    %vm1605 = vcmp.eq.s32.totalorder %v1603, 1
    %vm1606 = vcmp.eq.s32.totalorder %v1604, 1
    %v1607 = vsub.f32 1.0, %v34
    %v1608 = vlaneseq
    %v1609 = vshrl.u32 %v1608, 7
    %v1610 = vsub.s32 0, %v1609
    %v1611 = vrot.slane %v34, %v1610
    %v1612 = vlaneseq
    %v1613 = vshrl.u32 %v1612, 7
    %v1614 = vsub.s32 0, %v1613
    %v1615 = vrot.slane %v1607, %v1614
    %v1616 = vsel %vm1605, %v1611, %v1615
    %v1617 = vsel %vm1606, %v1611, %v1615
    %v1618 = vshra.s32 %v83, 2
    %v1619 = vshra.s32 %v84, 2
    %v1620 = vand.u32 %v1618, 1
    %v1621 = vand.u32 %v1619, 1
    %vm1622 = vcmp.eq.s32.totalorder %v1620, 1
    %vm1623 = vcmp.eq.s32.totalorder %v1621, 1
    %v1624 = vsub.f32 1.0, %v46
    %v1625 = vlaneseq
    %v1626 = vshrl.u32 %v1625, 7
    %v1627 = vsub.s32 0, %v1626
    %v1628 = vrot.slane %v46, %v1627
    %v1629 = vlaneseq
    %v1630 = vshrl.u32 %v1629, 7
    %v1631 = vsub.s32 0, %v1630
    %v1632 = vrot.slane %v1624, %v1631
    %v1633 = vsel %vm1622, %v1628, %v1632
    %v1634 = vsel %vm1623, %v1628, %v1632
    %v1635 = vmul.f32 %v1616, %v1633
    %v1636 = vmul.f32 %v1617, %v1634
    %v1637 = vshra.s32 %v83, 1
    %v1638 = vshra.s32 %v84, 1
    %v1639 = vand.u32 %v1637, 1
    %v1640 = vand.u32 %v1638, 1
    %vm1641 = vcmp.eq.s32.totalorder %v1639, 1
    %vm1642 = vcmp.eq.s32.totalorder %v1640, 1
    %v1643 = vsub.f32 1.0, %v58
    %v1644 = vlaneseq
    %v1645 = vshrl.u32 %v1644, 7
    %v1646 = vsub.s32 0, %v1645
    %v1647 = vrot.slane %v58, %v1646
    %v1648 = vlaneseq
    %v1649 = vshrl.u32 %v1648, 7
    %v1650 = vsub.s32 0, %v1649
    %v1651 = vrot.slane %v1643, %v1650
    %v1652 = vsel %vm1641, %v1647, %v1651
    %v1653 = vsel %vm1642, %v1647, %v1651
    %v1654 = vmul.f32 %v1635, %v1652
    %v1655 = vmul.f32 %v1636, %v1653
    %v1656 = vand.u32 %v83, 1
    %v1657 = vand.u32 %v84, 1
    %vm1658 = vcmp.eq.s32.totalorder %v1656, 1
    %vm1659 = vcmp.eq.s32.totalorder %v1657, 1
    %v1660 = vsub.f32 1.0, %v70
    %v1661 = vlaneseq
    %v1662 = vshrl.u32 %v1661, 7
    %v1663 = vsub.s32 0, %v1662
    %v1664 = vrot.slane %v70, %v1663
    %v1665 = vlaneseq
    %v1666 = vshrl.u32 %v1665, 7
    %v1667 = vsub.s32 0, %v1666
    %v1668 = vrot.slane %v1660, %v1667
    %v1669 = vsel %vm1658, %v1664, %v1668
    %v1670 = vsel %vm1659, %v1664, %v1668
    %v1671 = vmul.f32 %v1654, %v1669
    %v1672 = vmul.f32 %v1655, %v1670
    %v1673 = vlaneseq
    %v1674 = vshrl.u32 %v1673, 7
    %v1675 = vsub.s32 0, %v1674
    %v1676 = vrot.slane %v79, %v1675
    %v1677 = vmul.f32 %v1671, %v1676
    %v1678 = vmul.f32 %v1672, %v1676
    %v1679 = vmul.f32 %v1585, %v1677
    %v1680 = vmul.f32 %v1586, %v1678
    %v1681 = vmul.f32 %v1587, %v1677
    %v1682 = vmul.f32 %v1588, %v1678
    %v1683 = vmul.f32 %v1589, %v1677
    %v1684 = vmul.f32 %v1590, %v1678
    %v1685 = vmul.f32 %v1591, %v1677
    %v1686 = vmul.f32 %v1592, %v1678
    %v1687 = vmul.f32 %v1593, %v1677
    %v1688 = vmul.f32 %v1594, %v1678
    %v1689 = vmul.f32 %v1595, %v1677
    %v1690 = vmul.f32 %v1596, %v1678
    %v1691 = vmul.f32 %v1597, %v1677
    %v1692 = vmul.f32 %v1598, %v1678
    %v1693 = vmul.f32 %v1599, %v1677
    %v1694 = vmul.f32 %v1600, %v1678
    %v1695 = vadd.f32 %v1679, %v1680
    %v1696 = vrot.slane %v1695, 4
    %v1697 = vadd.f32 %v1695, %v1696
    %v1698 = vrot.slane %v1697, 2
    %v1699 = vadd.f32 %v1697, %v1698
    %v1700 = vrot.slane %v1699, 1
    %v1701 = vadd.f32 %v1699, %v1700
    %v1702 = vadd.f32 %v1681, %v1682
    %v1703 = vrot.slane %v1702, 4
    %v1704 = vadd.f32 %v1702, %v1703
    %v1705 = vrot.slane %v1704, 2
    %v1706 = vadd.f32 %v1704, %v1705
    %v1707 = vrot.slane %v1706, 1
    %v1708 = vadd.f32 %v1706, %v1707
    %v1709 = vadd.f32 %v1683, %v1684
    %v1710 = vrot.slane %v1709, 4
    %v1711 = vadd.f32 %v1709, %v1710
    %v1712 = vrot.slane %v1711, 2
    %v1713 = vadd.f32 %v1711, %v1712
    %v1714 = vrot.slane %v1713, 1
    %v1715 = vadd.f32 %v1713, %v1714
    %v1716 = vadd.f32 %v1685, %v1686
    %v1717 = vrot.slane %v1716, 4
    %v1718 = vadd.f32 %v1716, %v1717
    %v1719 = vrot.slane %v1718, 2
    %v1720 = vadd.f32 %v1718, %v1719
    %v1721 = vrot.slane %v1720, 1
    %v1722 = vadd.f32 %v1720, %v1721
    %v1723 = vadd.f32 %v1687, %v1688
    %v1724 = vrot.slane %v1723, 4
    %v1725 = vadd.f32 %v1723, %v1724
    %v1726 = vrot.slane %v1725, 2
    %v1727 = vadd.f32 %v1725, %v1726
    %v1728 = vrot.slane %v1727, 1
    %v1729 = vadd.f32 %v1727, %v1728
    %v1730 = vadd.f32 %v1689, %v1690
    %v1731 = vrot.slane %v1730, 4
    %v1732 = vadd.f32 %v1730, %v1731
    %v1733 = vrot.slane %v1732, 2
    %v1734 = vadd.f32 %v1732, %v1733
    %v1735 = vrot.slane %v1734, 1
    %v1736 = vadd.f32 %v1734, %v1735
    %v1737 = vadd.f32 %v1691, %v1692
    %v1738 = vrot.slane %v1737, 4
    %v1739 = vadd.f32 %v1737, %v1738
    %v1740 = vrot.slane %v1739, 2
    %v1741 = vadd.f32 %v1739, %v1740
    %v1742 = vrot.slane %v1741, 1
    %v1743 = vadd.f32 %v1741, %v1742
    %v1744 = vadd.f32 %v1693, %v1694
    %v1745 = vrot.slane %v1744, 4
    %v1746 = vadd.f32 %v1744, %v1745
    %v1747 = vrot.slane %v1746, 2
    %v1748 = vadd.f32 %v1746, %v1747
    %v1749 = vrot.slane %v1748, 1
    %v1750 = vadd.f32 %v1748, %v1749
    %vm1759 = vcmask 1041409
    %v1760 = vsel %vm1759, %v1708, %v1701
    %vm1761 = vcmask 1042434
    %v1762 = vsel %vm1761, %v1715, %v1760
    %vm1763 = vcmask 1043459
    %v1764 = vsel %vm1763, %v1722, %v1762
    %vm1765 = vcmask 1044484
    %v1766 = vsel %vm1765, %v1729, %v1764
    %vm1767 = vcmask 1045509
    %v1768 = vsel %vm1767, %v1736, %v1766
    %vm1769 = vcmask 1046534
    %v1770 = vsel %vm1769, %v1743, %v1768
    %vm1771 = vcmask 1047559
    %v1772 = vsel %vm1771, %v1750, %v1770
    %1774 = vst [vmem:[#allocation2] sm:$0xff] %v1772
    // Predicated region
    $region30: #{tpu_custom_call.1} parent=1 // pred_check
      _
    $region31: #{tpu_custom_call.1} parent=1 // pred_check_branch
      %1776 = sbr.rel (0) target = $region33
    $region32: #{tpu_custom_call.1} parent=1 // pred_region
      %s1778 = ssub.s32 128, 128
      %1779 = vsyncadd [#allocation3], %s1778
      %s1781 = sshll.u32 [#allocation2], 4
      %s1782 = int_to_ptr.vmem [resolvable:$true] %s1781
      %1784 = dma.vmem_to_hbm [thread:$0]  %s1782, 128, %s7, [#allocation3]
    $region33: #{tpu_custom_call.1} parent=1 // pred_fallthru
      _
    // Predicated region
    $region34: #{tpu_custom_call.1} parent=1 // pred_check
      _
    $region35: #{tpu_custom_call.1} parent=1 // pred_check_branch
      %1786 = sbr.rel (0) target = $region37
    $region36: #{tpu_custom_call.1} parent=1 // pred_region
      %1787 = dma.done [#allocation3], 128
    $region37: #{tpu_custom_call.1} parent=1 // pred_fallthru
      _
    %1788 = vsyncpa [#allocation3], 1

</llo_original>
